<compile_context>
chip_gen: v5e
topology: v5e:2x2
jax: 0.10.0
libtpu: 0.0.40
codegen_flags: <defaults>
</compile_context>

<pallas_src>
import jax
import jax.numpy as jnp
from jax.experimental import pallas as pl
from jax.experimental.pallas import tpu as pltpu


def _leaky_relu(x, slope=0.2):
    return jnp.where(x > 0, x, slope * x)


def _round_up(n, m):
    return ((n + m - 1) // m) * m


def generator_mlp_kernel(noise_ref, t_ref,
                         w1b_ref,
                         w2_ref, b2_ref,
                         w3_ref, b3_ref,
                         w4_ref, b4_ref,
                         out_ref):
    # Layer 1: leaky(noise @ W1[L:] + (embed[labels] @ W1[:L] + b1))
    h1 = _leaky_relu(
        jnp.dot(noise_ref[...], w1b_ref[...], preferred_element_type=jnp.float32)
        + t_ref[...].astype(jnp.float32))
    h2 = _leaky_relu(
        jnp.dot(h1.astype(jnp.bfloat16), w2_ref[...],
                preferred_element_type=jnp.float32) + b2_ref[...])
    h3 = _leaky_relu(
        jnp.dot(h2.astype(jnp.bfloat16), w3_ref[...],
                preferred_element_type=jnp.float32) + b3_ref[...])
    logits = (jnp.dot(h3.astype(jnp.bfloat16), w4_ref[...],
                      preferred_element_type=jnp.float32)
              + b4_ref[...])                                     # (TB, Cpad) f32
    # Padded class lanes already hold -1e30 (folded into b4; W4 pad cols are 0),
    # so exp underflows to 0 and they never contribute to max / denominator.
    m = jnp.max(logits, axis=-1, keepdims=True)
    e = jnp.exp(logits - m)
    denom = jnp.sum(e, axis=-1, keepdims=True)
    out_ref[...] = (e * pl.reciprocal(denom, approx=True)).astype(out_ref.dtype)


def generator_forward(labels, noise, params, *, batch_tile=512,
                      out_dtype=jnp.float32):
    """labels: (B,) int32; noise: (B, latent_dim) f32 -> (B, num_classes) f32."""
    embed = params["embed"]                      # (C, L)
    w1 = params["w1"]                            # (2L, 128)
    L = embed.shape[1]
    d1 = w1.shape[1]
    d2 = params["w2"].shape[1]
    d3 = params["w3"].shape[1]
    num_classes = params["w4"].shape[1]
    B = noise.shape[0]

    # Fuse embedding gather + the "label half" of layer 1 into a tiny table.
    t_table = (jnp.dot(embed, w1[:L], precision=jax.lax.Precision.HIGHEST)
               + params["b1"].reshape(1, d1))                    # (C, 128) f32
    t_rows = jnp.take(t_table, labels, axis=0).astype(jnp.bfloat16)   # (B, 128)
    noise_b = noise.astype(jnp.bfloat16)                              # (B, L)

    c_pad = _round_up(num_classes, 128)          # lane-dense logits/output

    # Batch tiling: multiples of 16 (bf16 sublane tile); for batches that fit a
    # single tile but are big enough, split into 2 steps so v7x's two
    # TensorCores both get work via dimension_semantics=("parallel",).
    tb = max(16, _round_up(batch_tile, 16))
    if _round_up(B, 16) <= tb:
        if B >= 64:
            tb = _round_up(pl.cdiv(B, 2), 16)
        else:
            tb = max(16, _round_up(B, 16))
    b_pad = _round_up(B, tb)
    if b_pad != B:
        noise_b = jnp.pad(noise_b, ((0, b_pad - B), (0, 0)))
        t_rows = jnp.pad(t_rows, ((0, b_pad - B), (0, 0)))

    # Weights: bf16 for the MXU; biases f32.  Class padding handled once here:
    # W4 pad cols zero, b4 pad cols -1e30 (acts as the softmax mask).
    w1b = w1[L:].astype(jnp.bfloat16)                            # (L, 128)
    w2 = params["w2"].astype(jnp.bfloat16)
    w3 = params["w3"].astype(jnp.bfloat16)
    w4p = jnp.zeros((d3, c_pad), jnp.bfloat16).at[:, :num_classes].set(
        params["w4"].astype(jnp.bfloat16))
    b2 = params["b2"].reshape(1, d2).astype(jnp.float32)
    b3 = params["b3"].reshape(1, d3).astype(jnp.float32)
    b4p = jnp.full((1, c_pad), -1e30, jnp.float32).at[:, :num_classes].set(
        params["b4"].reshape(-1).astype(jnp.float32))

    const = lambda i: (0, 0)          # weights/biases: VMEM-resident, no re-DMA
    grid = (b_pad // tb,)

    out = pl.pallas_call(
        generator_mlp_kernel,
        out_shape=jax.ShapeDtypeStruct((b_pad, c_pad), out_dtype),
        grid=grid,
        in_specs=[
            pl.BlockSpec((tb, L), lambda i: (i, 0)),      # noise rows
            pl.BlockSpec((tb, d1), lambda i: (i, 0)),     # T[labels] rows
            pl.BlockSpec((L, d1), const),
            pl.BlockSpec((d1, d2), const), pl.BlockSpec((1, d2), const),
            pl.BlockSpec((d2, d3), const), pl.BlockSpec((1, d3), const),
            pl.BlockSpec((d3, c_pad), const), pl.BlockSpec((1, c_pad), const),
        ],
        out_specs=pl.BlockSpec((tb, c_pad), lambda i: (i, 0)),
        compiler_params=pltpu.CompilerParams(
            dimension_semantics=("parallel",)),
    )(noise_b, t_rows, w1b, w2, b2, w3, b3, w4p, b4p)

    return out[:B, :num_classes].astype(jnp.float32)


def generator_reference(labels, noise, params):
    """Pure-JAX f32 reference of the PyTorch forward."""
    gen_input = jnp.take(params["embed"], labels, axis=0)
    h = jnp.concatenate([gen_input, noise], axis=-1)
    for wk, bk in (("w1", "b1"), ("w2", "b2"), ("w3", "b3")):
        h = jnp.dot(h, params[wk]) + params[bk]
        h = jnp.where(h > 0, h, 0.2 * h)
    logits = jnp.dot(h, params["w4"]) + params["b4"]
    return jax.nn.softmax(logits, axis=-1)


def init_params(key, latent_dim, num_classes):
    """Deterministic init mirroring PyTorch defaults (shapes are what matter)."""
    ks = jax.random.split(key, 9)

    def linear(kw, kb, fan_in, fan_out):
        bound = 1.0 / jnp.sqrt(jnp.float32(fan_in))
        w = jax.random.uniform(kw, (fan_in, fan_out), jnp.float32, -bound, bound)
        b = jax.random.uniform(kb, (1, fan_out), jnp.float32, -bound, bound)
        return w, b

    embed = jax.random.normal(ks[0], (num_classes, latent_dim), jnp.float32)
    w1, b1 = linear(ks[1], ks[2], latent_dim * 2, 128)
    w2, b2 = linear(ks[3], ks[4], 128, 256)
    w3, b3 = linear(ks[5], ks[6], 256, 512)
    w4, b4 = linear(ks[7], ks[8], 512, num_classes)
    return {"embed": embed,
            "w1": w1, "b1": b1, "w2": w2, "b2": b2,
            "w3": w3, "b3": b3, "w4": w4, "b4": b4}


if __name__ == "__main__":
    latent_dim = 32
    num_classes = 10
    batch = 32

    key = jax.random.PRNGKey(0)
    k_params, k_labels, k_noise = jax.random.split(key, 3)

    params = init_params(k_params, latent_dim, num_classes)
    labels = jax.random.randint(k_labels, (batch,), 0, num_classes, dtype=jnp.int32)
    noise = jax.random.normal(k_noise, (batch, latent_dim), jnp.float32)

    # Small batch_tile here just to exercise the multi-step grid path; real
    # deployments should keep the default (512) for full MXU rows.
    probs = generator_forward(labels, noise, params, batch_tile=16)
    probs = jax.block_until_ready(probs)

    assert probs.shape == (batch, num_classes)
    # rows sum to 1 (approx reciprocal -> slightly looser tolerance)
    assert bool(jnp.all(jnp.abs(jnp.sum(probs, axis=1) - 1.0) < 5e-3))
    # matches the f32 pure-JAX reference within bf16 matmul error
    ref = generator_reference(labels, noise, params)
    assert bool(jnp.max(jnp.abs(probs - ref)) < 5e-2)
    print("KERNEL_OK")
</pallas_src>

<mosaic_0001>
module attributes {stable_mosaic.version = 11 : i64} {
  func.func @generator_mlp_kernel(%arg0: i32, %arg1: memref<16x32xbf16, #tpu.memory_space<vmem>>, %arg2: memref<16x128xbf16, #tpu.memory_space<vmem>>, %arg3: memref<32x128xbf16, #tpu.memory_space<vmem>>, %arg4: memref<128x256xbf16, #tpu.memory_space<vmem>>, %arg5: memref<1x256xf32, #tpu.memory_space<vmem>>, %arg6: memref<256x512xbf16, #tpu.memory_space<vmem>>, %arg7: memref<1x512xf32, #tpu.memory_space<vmem>>, %arg8: memref<512x128xbf16, #tpu.memory_space<vmem>>, %arg9: memref<1x128xf32, #tpu.memory_space<vmem>>, %arg10: memref<16x128xf32, #tpu.memory_space<vmem>>) attributes {dimension_semantics = [#tpu.dimension_semantics<parallel>], iteration_bounds = array<i64: 2>, scalar_prefetch = 0 : i64, scratch_operands = 0 : i64, tpu.core_type = #tpu.core_type<tc>, window_params = [{transform_indices = @transform_0, window_bounds = array<i64: 16, 32>}, {transform_indices = @transform_1, window_bounds = array<i64: 16, 128>}, {pipeline_mode = #tpu.pipeline_mode<synchronous>, transform_indices = @transform_2, window_bounds = array<i64: 32, 128>}, {pipeline_mode = #tpu.pipeline_mode<synchronous>, transform_indices = @transform_3, window_bounds = array<i64: 128, 256>}, {pipeline_mode = #tpu.pipeline_mode<synchronous>, transform_indices = @transform_4, window_bounds = array<i64: 1, 256>}, {pipeline_mode = #tpu.pipeline_mode<synchronous>, transform_indices = @transform_5, window_bounds = array<i64: 256, 512>}, {pipeline_mode = #tpu.pipeline_mode<synchronous>, transform_indices = @transform_6, window_bounds = array<i64: 1, 512>}, {pipeline_mode = #tpu.pipeline_mode<synchronous>, transform_indices = @transform_7, window_bounds = array<i64: 512, 128>}, {pipeline_mode = #tpu.pipeline_mode<synchronous>, transform_indices = @transform_8, window_bounds = array<i64: 1, 128>}, {transform_indices = @transform_9, window_bounds = array<i64: 16, 128>}]} {
    %c0 = arith.constant 0 : index
    %c0_0 = arith.constant 0 : index
    %0 = vector.load %arg1[%c0, %c0_0] : memref<16x32xbf16, #tpu.memory_space<vmem>>, vector<16x32xbf16>
    %c0_1 = arith.constant 0 : index
    %c0_2 = arith.constant 0 : index
    %1 = vector.load %arg3[%c0_1, %c0_2] : memref<32x128xbf16, #tpu.memory_space<vmem>>, vector<32x128xbf16>
    %cst = arith.constant dense<0.000000e+00> : vector<16x128xf32>
    %2 = tpu.matmul %0, %1, %cst {dimension_numbers = #tpu.dot_dimension_numbers<[1], [0], [0], [1], [0, 0, 1, 1], [], []>} : vector<16x32xbf16>, vector<32x128xbf16>, vector<16x128xf32> -> vector<16x128xf32>
    %c0_3 = arith.constant 0 : index
    %c0_4 = arith.constant 0 : index
    %3 = vector.load %arg2[%c0_3, %c0_4] : memref<16x128xbf16, #tpu.memory_space<vmem>>, vector<16x128xbf16>
    %4 = arith.extf %3 : vector<16x128xbf16> to vector<16x128xf32>
    %5 = arith.addf %2, %4 : vector<16x128xf32>
    %cst_5 = arith.constant 0.000000e+00 : f32
    %6 = vector.broadcast %cst_5 : f32 to vector<16x128xf32>
    %7 = arith.cmpf ogt, %5, %6 : vector<16x128xf32>
    %cst_6 = arith.constant 2.000000e-01 : f32
    %8 = vector.broadcast %cst_6 : f32 to vector<16x128xf32>
    %9 = arith.mulf %8, %5 : vector<16x128xf32>
    %10 = arith.select %7, %5, %9 : vector<16x128xi1>, vector<16x128xf32>
    %11 = arith.truncf %10 : vector<16x128xf32> to vector<16x128xbf16>
    %c0_7 = arith.constant 0 : index
    %c0_8 = arith.constant 0 : index
    %12 = vector.load %arg4[%c0_7, %c0_8] : memref<128x256xbf16, #tpu.memory_space<vmem>>, vector<128x256xbf16>
    %cst_9 = arith.constant dense<0.000000e+00> : vector<16x256xf32>
    %13 = tpu.matmul %11, %12, %cst_9 {dimension_numbers = #tpu.dot_dimension_numbers<[1], [0], [0], [1], [0, 0, 1, 1], [], []>} : vector<16x128xbf16>, vector<128x256xbf16>, vector<16x256xf32> -> vector<16x256xf32>
    %c0_10 = arith.constant 0 : index
    %c0_11 = arith.constant 0 : index
    %14 = vector.load %arg5[%c0_10, %c0_11] : memref<1x256xf32, #tpu.memory_space<vmem>>, vector<1x256xf32>
    %15 = vector.broadcast %14 : vector<1x256xf32> to vector<16x256xf32>
    %16 = arith.addf %13, %15 : vector<16x256xf32>
    %cst_12 = arith.constant 0.000000e+00 : f32
    %17 = vector.broadcast %cst_12 : f32 to vector<16x256xf32>
    %18 = arith.cmpf ogt, %16, %17 : vector<16x256xf32>
    %cst_13 = arith.constant 2.000000e-01 : f32
    %19 = vector.broadcast %cst_13 : f32 to vector<16x256xf32>
    %20 = arith.mulf %19, %16 : vector<16x256xf32>
    %21 = arith.select %18, %16, %20 : vector<16x256xi1>, vector<16x256xf32>
    %22 = arith.truncf %21 : vector<16x256xf32> to vector<16x256xbf16>
    %c0_14 = arith.constant 0 : index
    %c0_15 = arith.constant 0 : index
    %23 = vector.load %arg6[%c0_14, %c0_15] : memref<256x512xbf16, #tpu.memory_space<vmem>>, vector<256x512xbf16>
    %cst_16 = arith.constant dense<0.000000e+00> : vector<16x512xf32>
    %24 = tpu.matmul %22, %23, %cst_16 {dimension_numbers = #tpu.dot_dimension_numbers<[1], [0], [0], [1], [0, 0, 1, 1], [], []>} : vector<16x256xbf16>, vector<256x512xbf16>, vector<16x512xf32> -> vector<16x512xf32>
    %c0_17 = arith.constant 0 : index
    %c0_18 = arith.constant 0 : index
    %25 = vector.load %arg7[%c0_17, %c0_18] : memref<1x512xf32, #tpu.memory_space<vmem>>, vector<1x512xf32>
    %26 = vector.broadcast %25 : vector<1x512xf32> to vector<16x512xf32>
    %27 = arith.addf %24, %26 : vector<16x512xf32>
    %cst_19 = arith.constant 0.000000e+00 : f32
    %28 = vector.broadcast %cst_19 : f32 to vector<16x512xf32>
    %29 = arith.cmpf ogt, %27, %28 : vector<16x512xf32>
    %cst_20 = arith.constant 2.000000e-01 : f32
    %30 = vector.broadcast %cst_20 : f32 to vector<16x512xf32>
    %31 = arith.mulf %30, %27 : vector<16x512xf32>
    %32 = arith.select %29, %27, %31 : vector<16x512xi1>, vector<16x512xf32>
    %33 = arith.truncf %32 : vector<16x512xf32> to vector<16x512xbf16>
    %c0_21 = arith.constant 0 : index
    %c0_22 = arith.constant 0 : index
    %34 = vector.load %arg8[%c0_21, %c0_22] : memref<512x128xbf16, #tpu.memory_space<vmem>>, vector<512x128xbf16>
    %cst_23 = arith.constant dense<0.000000e+00> : vector<16x128xf32>
    %35 = tpu.matmul %33, %34, %cst_23 {dimension_numbers = #tpu.dot_dimension_numbers<[1], [0], [0], [1], [0, 0, 1, 1], [], []>} : vector<16x512xbf16>, vector<512x128xbf16>, vector<16x128xf32> -> vector<16x128xf32>
    %c0_24 = arith.constant 0 : index
    %c0_25 = arith.constant 0 : index
    %36 = vector.load %arg9[%c0_24, %c0_25] : memref<1x128xf32, #tpu.memory_space<vmem>>, vector<1x128xf32>
    %37 = vector.broadcast %36 : vector<1x128xf32> to vector<16x128xf32>
    %38 = arith.addf %35, %37 : vector<16x128xf32>
    %cst_26 = arith.constant dense<0xFF800000> : vector<16xf32>
    %39 = vector.multi_reduction <maximumf>, %38, %cst_26 [1] : vector<16x128xf32> to vector<16xf32>
    %40 = vector.shape_cast %39 : vector<16xf32> to vector<16x1xf32>
    %41 = vector.broadcast %40 : vector<16x1xf32> to vector<16x128xf32>
    %42 = arith.subf %38, %41 : vector<16x128xf32>
    %43 = math.exp %42 : vector<16x128xf32>
    %cst_27 = arith.constant dense<0.000000e+00> : vector<16xf32>
    %44 = vector.multi_reduction <add>, %43, %cst_27 [1] : vector<16x128xf32> to vector<16xf32>
    %45 = vector.shape_cast %44 : vector<16xf32> to vector<16x1xf32>
    %46 = tpu.reciprocal %45 {approx = true} : vector<16x1xf32> -> vector<16x1xf32>
    %47 = vector.broadcast %46 : vector<16x1xf32> to vector<16x128xf32>
    %48 = arith.mulf %43, %47 : vector<16x128xf32>
    %c0_28 = arith.constant 0 : index
    %c0_29 = arith.constant 0 : index
    %49 = vector.load %arg10[%c0_28, %c0_29] : memref<16x128xf32, #tpu.memory_space<vmem>>, vector<16x128xf32>
    tpu.vector_store %arg10[%c0_28, %c0_29], %48 {strides = array<i32>} : memref<16x128xf32, #tpu.memory_space<vmem>>, vector<16x128xf32>,
    return
  }
  func.func @transform_0(%arg0: i32) -> (i32, i32) {
    %c0_i32 = arith.constant 0 : i32
    %c0_i32_0 = arith.constant 0 : i32
    return %arg0, %c0_i32 : i32, i32
  }
  func.func @transform_1(%arg0: i32) -> (i32, i32) {
    %c0_i32 = arith.constant 0 : i32
    %c0_i32_0 = arith.constant 0 : i32
    return %arg0, %c0_i32 : i32, i32
  }
  func.func @transform_2(%arg0: i32) -> (i32, i32) {
    %c0_i32 = arith.constant 0 : i32
    %c0_i32_0 = arith.constant 0 : i32
    %c0_i32_1 = arith.constant 0 : i32
    return %c0_i32, %c0_i32_0 : i32, i32
  }
  func.func @transform_3(%arg0: i32) -> (i32, i32) {
    %c0_i32 = arith.constant 0 : i32
    %c0_i32_0 = arith.constant 0 : i32
    %c0_i32_1 = arith.constant 0 : i32
    return %c0_i32, %c0_i32_0 : i32, i32
  }
  func.func @transform_4(%arg0: i32) -> (i32, i32) {
    %c0_i32 = arith.constant 0 : i32
    %c0_i32_0 = arith.constant 0 : i32
    %c0_i32_1 = arith.constant 0 : i32
    return %c0_i32, %c0_i32_0 : i32, i32
  }
  func.func @transform_5(%arg0: i32) -> (i32, i32) {
    %c0_i32 = arith.constant 0 : i32
    %c0_i32_0 = arith.constant 0 : i32
    %c0_i32_1 = arith.constant 0 : i32
    return %c0_i32, %c0_i32_0 : i32, i32
  }
  func.func @transform_6(%arg0: i32) -> (i32, i32) {
    %c0_i32 = arith.constant 0 : i32
    %c0_i32_0 = arith.constant 0 : i32
    %c0_i32_1 = arith.constant 0 : i32
    return %c0_i32, %c0_i32_0 : i32, i32
  }
  func.func @transform_7(%arg0: i32) -> (i32, i32) {
    %c0_i32 = arith.constant 0 : i32
    %c0_i32_0 = arith.constant 0 : i32
    %c0_i32_1 = arith.constant 0 : i32
    return %c0_i32, %c0_i32_0 : i32, i32
  }
  func.func @transform_8(%arg0: i32) -> (i32, i32) {
    %c0_i32 = arith.constant 0 : i32
    %c0_i32_0 = arith.constant 0 : i32
    %c0_i32_1 = arith.constant 0 : i32
    return %c0_i32, %c0_i32_0 : i32, i32
  }
  func.func @transform_9(%arg0: i32) -> (i32, i32) {
    %c0_i32 = arith.constant 0 : i32
    %c0_i32_0 = arith.constant 0 : i32
    return %arg0, %c0_i32 : i32, i32
  }
}

</mosaic_0001>

<llo_original>
// kernel: tpu_custom_call.1
$region0: #{tpu_custom_call.1}
  #allocation0 [shape = 'u32[]', space=smem, size = 0x4, offset = 0x4, fixed_abs, tag = 'smem constant byte address 0x4 - core index']
  #allocation1 [shape = 'u32[72,128]{1,0:T(1,128)}', space=vmem, size = 0x9000, scoped, tag = 'internal scratch']
  %s0 = inlined_call_operand.hbm [shape: bf16[32,32], index: 0, kind: input, shape index: {}]
  %s1 = inlined_call_operand.hbm [shape: bf16[32,128], index: 1, kind: input, shape index: {}]
  %s2 = inlined_call_operand.hbm [shape: bf16[32,128], index: 2, kind: input, shape index: {}]
  %s3 = inlined_call_operand.hbm [shape: bf16[128,256], index: 3, kind: input, shape index: {}]
  %s4 = inlined_call_operand.hbm [shape: f32[1,256], index: 4, kind: input, shape index: {}]
  %s5 = inlined_call_operand.hbm [shape: bf16[256,512], index: 5, kind: input, shape index: {}]
  %s6 = inlined_call_operand.vmem [shape: f32[1,512], index: 6, kind: input, shape index: {}]
  %s7 = inlined_call_operand.hbm [shape: bf16[512,128], index: 7, kind: input, shape index: {}]
  %s8 = inlined_call_operand.vmem [shape: f32[1,128], index: 8, kind: input, shape index: {}]
  %s9 = inlined_call_operand.hbm [shape: f32[32,128], index: 9, kind: output, shape index: {}]
  %s10 = sld [smem:[#allocation0]]
  $region97: #{tpu_custom_call.1} parent=0
    _
  %s12 = ssub.s32 1, %s10
  %s13 = scalar_select 0, %s12, %s10
  $region1: #{tpu_custom_call.1} parent=0
    #allocation2 [shape = 'u8[8192]{0}', space=vmem, size = 0x2000, scoped, tag = 'input window, operand 0']
    #allocation3 [shape = 's32[2]{0}', space=sflag, size = 0x8, scoped, tag = 'scoped memory for tpu_custom_call.1']
    #allocation4 [shape = 's32[2]{0}', space=sflag, size = 0x8, scoped, tag = 'scoped memory for tpu_custom_call.1']
    #allocation5 [shape = 'u8[8192]{0}', space=vmem, size = 0x2000, scoped, tag = 'input window, operand 1']
    #allocation6 [shape = 's32[2]{0}', space=sflag, size = 0x8, scoped, tag = 'scoped memory for tpu_custom_call.1']
    #allocation7 [shape = 'u8[8192]{0}', space=vmem, size = 0x2000, scoped, tag = 'input window, operand 2, single buffered']
    #allocation8 [shape = 'u8[65536]{0}', space=vmem, size = 0x10000, scoped, tag = 'input window, operand 3, single buffered']
    #allocation9 [shape = 's32[1]{0}', space=sflag, size = 0x4, scoped, tag = 'scoped memory for tpu_custom_call.1']
    #allocation10 [shape = 'u8[1024]{0}', space=vmem, size = 0x400, scoped, tag = 'input window, operand 4, single buffered']
    #allocation11 [shape = 'u8[262144]{0}', space=vmem, size = 0x40000, scoped, tag = 'input window, operand 5, single buffered']
    #allocation12 [shape = 's32[1]{0}', space=sflag, size = 0x4, scoped, tag = 'scoped memory for tpu_custom_call.1']
    #allocation13 [shape = 'u8[131072]{0}', space=vmem, size = 0x20000, scoped, tag = 'input window, operand 7, single buffered']
    #allocation14 [shape = 'u8[16384]{0}', space=vmem, size = 0x4000, scoped, tag = 'output window, operand 0']
    %14 = vsyncpa [#allocation3], 0
    %s15 = scalar_lea.sflag [#allocation3], 1
    %16 = vsyncpa %s15, 0
    %17 = vsyncpa [#allocation6], 0
    %s18 = scalar_lea.sflag [#allocation6], 1
    %19 = vsyncpa %s18, 0
    %20 = vsyncpa [#allocation9], 0
    %21 = vsyncpa [#allocation12], 0
    %22 = vsyncpa [#allocation4], 0
    %s23 = scalar_lea.sflag [#allocation4], 1
    %24 = vsyncpa %s23, 0
    loop: start=0, step=1, limit=4
    $region2: #{tpu_custom_call.1} parent=1 // loop_pre_header
      _
    $region3: #{tpu_custom_call.1} parent=1 // loop_header
      %s26 = sphi 0, %s30
      %p27 = scmp.ge.s32.totalorder %s26, 4
      %s36 = sphi 0, %s38
      %s39 = sphi 0, %s36
      %s40 = sphi 0, %s39
      %s56 = sphi 0, %s40
      %s62 = sphi 0, %s64
      %s65 = sphi 0, %s62
      %s66 = sphi 0, %s65
      %s82 = sphi 0, %s66
      %s86 = sphi 0, %s86
      %s88 = sphi 0, %s86
      %s89 = sphi 0, %s88
      %s103 = sphi 0, %s89
      %s107 = sphi 0, %s107
      %s109 = sphi 0, %s107
      %s110 = sphi 0, %s109
      %s124 = sphi 0, %s110
      %s128 = sphi 0, %s128
      %s130 = sphi 0, %s128
      %s131 = sphi 0, %s130
      %s145 = sphi 0, %s131
      %s149 = sphi 0, %s149
      %s151 = sphi 0, %s149
      %s152 = sphi 0, %s151
      %s166 = sphi 0, %s152
      %s170 = sphi 0, %s170
      %s172 = sphi 0, %s170
      %s173 = sphi 0, %s172
      %s187 = sphi 0, %s173
      %s191 = sphi 0, %s191
      %s193 = sphi 0, %s191
      %s194 = sphi 0, %s193
      %s208 = sphi 0, %s194
      %s212 = sphi 0, %s212
      %s214 = sphi 0, %s212
      %s215 = sphi 0, %s214
      %s229 = sphi 0, %s215
      %s235 = sphi 0, %s237
      %s238 = sphi 0, %s235
      %s239 = sphi 0, %s238
      %s255 = sphi 0, %s239
    $region4: #{tpu_custom_call.1} parent=1 // loop_header_branch
      %29 = sbr.rel (%p27) target = $region8
    $region5: #{tpu_custom_call.1} parent=1 // loop_body
      %s31 = ssub.s32 %s26, 1
      %s32 = ssub.s32 %s26, 2
      %s33 = sadd.s32 %s26, 1
      %s34 = ssub.s32 %s26, %s33
      %p35 = scmp.eq.s32.totalorder %s34, 0
      %s37 = sadd.s32 %s36, 1
      %s38 = scalar_select %p35, %s36, %s37
      %p41 = pneg %p35
      %p42 = scmp.eq.s32.totalorder %s26, 1
      %p43 = por %p41, %p42
      %p44 = scmp.ne.s32.totalorder %s36, %s39
      %p45 = scmp.eq.s32.totalorder %s26, 0
      %p46 = por %p44, %p45
      %p47 = scmp.ne.s32.totalorder %s36, %s39
      %p48 = scmp.eq.s32.totalorder %s31, 1
      %p49 = por %p47, %p48
      %p50 = scmp.ne.s32.totalorder %s39, %s40
      %p51 = scmp.eq.s32.totalorder %s31, 0
      %p52 = por %p50, %p51
      %p53 = scmp.ne.s32.totalorder %s39, %s40
      %p54 = scmp.eq.s32.totalorder %s32, 1
      %p55 = por %p53, %p54
      %p57 = scmp.ne.s32.totalorder %s40, %s56
      %p58 = scmp.eq.s32.totalorder %s32, 0
      %p59 = por %p57, %p58
      %s60 = ssub.s32 %s26, %s33
      %p61 = scmp.eq.s32.totalorder %s60, 0
      %s63 = sadd.s32 %s62, 1
      %s64 = scalar_select %p61, %s62, %s63
      %p67 = pneg %p61
      %p68 = scmp.eq.s32.totalorder %s26, 1
      %p69 = por %p67, %p68
      %p70 = scmp.ne.s32.totalorder %s62, %s65
      %p71 = scmp.eq.s32.totalorder %s26, 0
      %p72 = por %p70, %p71
      %p73 = scmp.ne.s32.totalorder %s62, %s65
      %p74 = scmp.eq.s32.totalorder %s31, 1
      %p75 = por %p73, %p74
      %p76 = scmp.ne.s32.totalorder %s65, %s66
      %p77 = scmp.eq.s32.totalorder %s31, 0
      %p78 = por %p76, %p77
      %p79 = scmp.ne.s32.totalorder %s65, %s66
      %p80 = scmp.eq.s32.totalorder %s32, 1
      %p81 = por %p79, %p80
      %p83 = scmp.ne.s32.totalorder %s66, %s82
      %p84 = scmp.eq.s32.totalorder %s32, 0
      %p85 = por %p83, %p84
      %s87 = sadd.s32 %s86, 1
      %p90 = scmp.eq.s32.totalorder %s26, 1
      %p91 = scmp.ne.s32.totalorder %s86, %s88
      %p92 = scmp.eq.s32.totalorder %s26, 0
      %p93 = por %p91, %p92
      %p94 = scmp.ne.s32.totalorder %s86, %s88
      %p95 = scmp.eq.s32.totalorder %s31, 1
      %p96 = por %p94, %p95
      %p97 = scmp.ne.s32.totalorder %s88, %s89
      %p98 = scmp.eq.s32.totalorder %s31, 0
      %p99 = por %p97, %p98
      %p100 = scmp.ne.s32.totalorder %s88, %s89
      %p101 = scmp.eq.s32.totalorder %s32, 1
      %p102 = por %p100, %p101
      %p104 = scmp.ne.s32.totalorder %s89, %s103
      %p105 = scmp.eq.s32.totalorder %s32, 0
      %p106 = por %p104, %p105
      %s108 = sadd.s32 %s107, 1
      %p111 = scmp.eq.s32.totalorder %s26, 1
      %p112 = scmp.ne.s32.totalorder %s107, %s109
      %p113 = scmp.eq.s32.totalorder %s26, 0
      %p114 = por %p112, %p113
      %p115 = scmp.ne.s32.totalorder %s107, %s109
      %p116 = scmp.eq.s32.totalorder %s31, 1
      %p117 = por %p115, %p116
      %p118 = scmp.ne.s32.totalorder %s109, %s110
      %p119 = scmp.eq.s32.totalorder %s31, 0
      %p120 = por %p118, %p119
      %p121 = scmp.ne.s32.totalorder %s109, %s110
      %p122 = scmp.eq.s32.totalorder %s32, 1
      %p123 = por %p121, %p122
      %p125 = scmp.ne.s32.totalorder %s110, %s124
      %p126 = scmp.eq.s32.totalorder %s32, 0
      %p127 = por %p125, %p126
      %s129 = sadd.s32 %s128, 1
      %p132 = scmp.eq.s32.totalorder %s26, 1
      %p133 = scmp.ne.s32.totalorder %s128, %s130
      %p134 = scmp.eq.s32.totalorder %s26, 0
      %p135 = por %p133, %p134
      %p136 = scmp.ne.s32.totalorder %s128, %s130
      %p137 = scmp.eq.s32.totalorder %s31, 1
      %p138 = por %p136, %p137
      %p139 = scmp.ne.s32.totalorder %s130, %s131
      %p140 = scmp.eq.s32.totalorder %s31, 0
      %p141 = por %p139, %p140
      %p142 = scmp.ne.s32.totalorder %s130, %s131
      %p143 = scmp.eq.s32.totalorder %s32, 1
      %p144 = por %p142, %p143
      %p146 = scmp.ne.s32.totalorder %s131, %s145
      %p147 = scmp.eq.s32.totalorder %s32, 0
      %p148 = por %p146, %p147
      %s150 = sadd.s32 %s149, 1
      %p153 = scmp.eq.s32.totalorder %s26, 1
      %p154 = scmp.ne.s32.totalorder %s149, %s151
      %p155 = scmp.eq.s32.totalorder %s26, 0
      %p156 = por %p154, %p155
      %p157 = scmp.ne.s32.totalorder %s149, %s151
      %p158 = scmp.eq.s32.totalorder %s31, 1
      %p159 = por %p157, %p158
      %p160 = scmp.ne.s32.totalorder %s151, %s152
      %p161 = scmp.eq.s32.totalorder %s31, 0
      %p162 = por %p160, %p161
      %p163 = scmp.ne.s32.totalorder %s151, %s152
      %p164 = scmp.eq.s32.totalorder %s32, 1
      %p165 = por %p163, %p164
      %p167 = scmp.ne.s32.totalorder %s152, %s166
      %p168 = scmp.eq.s32.totalorder %s32, 0
      %p169 = por %p167, %p168
      %s171 = sadd.s32 %s170, 1
      %p174 = scmp.eq.s32.totalorder %s26, 1
      %p175 = scmp.ne.s32.totalorder %s170, %s172
      %p176 = scmp.eq.s32.totalorder %s26, 0
      %p177 = por %p175, %p176
      %p178 = scmp.ne.s32.totalorder %s170, %s172
      %p179 = scmp.eq.s32.totalorder %s31, 1
      %p180 = por %p178, %p179
      %p181 = scmp.ne.s32.totalorder %s172, %s173
      %p182 = scmp.eq.s32.totalorder %s31, 0
      %p183 = por %p181, %p182
      %p184 = scmp.ne.s32.totalorder %s172, %s173
      %p185 = scmp.eq.s32.totalorder %s32, 1
      %p186 = por %p184, %p185
      %p188 = scmp.ne.s32.totalorder %s173, %s187
      %p189 = scmp.eq.s32.totalorder %s32, 0
      %p190 = por %p188, %p189
      %s192 = sadd.s32 %s191, 1
      %p195 = scmp.eq.s32.totalorder %s26, 1
      %p196 = scmp.ne.s32.totalorder %s191, %s193
      %p197 = scmp.eq.s32.totalorder %s26, 0
      %p198 = por %p196, %p197
      %p199 = scmp.ne.s32.totalorder %s191, %s193
      %p200 = scmp.eq.s32.totalorder %s31, 1
      %p201 = por %p199, %p200
      %p202 = scmp.ne.s32.totalorder %s193, %s194
      %p203 = scmp.eq.s32.totalorder %s31, 0
      %p204 = por %p202, %p203
      %p205 = scmp.ne.s32.totalorder %s193, %s194
      %p206 = scmp.eq.s32.totalorder %s32, 1
      %p207 = por %p205, %p206
      %p209 = scmp.ne.s32.totalorder %s194, %s208
      %p210 = scmp.eq.s32.totalorder %s32, 0
      %p211 = por %p209, %p210
      %s213 = sadd.s32 %s212, 1
      %p216 = scmp.eq.s32.totalorder %s26, 1
      %p217 = scmp.ne.s32.totalorder %s212, %s214
      %p218 = scmp.eq.s32.totalorder %s26, 0
      %p219 = por %p217, %p218
      %p220 = scmp.ne.s32.totalorder %s212, %s214
      %p221 = scmp.eq.s32.totalorder %s31, 1
      %p222 = por %p220, %p221
      %p223 = scmp.ne.s32.totalorder %s214, %s215
      %p224 = scmp.eq.s32.totalorder %s31, 0
      %p225 = por %p223, %p224
      %p226 = scmp.ne.s32.totalorder %s214, %s215
      %p227 = scmp.eq.s32.totalorder %s32, 1
      %p228 = por %p226, %p227
      %p230 = scmp.ne.s32.totalorder %s215, %s229
      %p231 = scmp.eq.s32.totalorder %s32, 0
      %p232 = por %p230, %p231
      %s233 = ssub.s32 %s26, %s33
      %p234 = scmp.eq.s32.totalorder %s233, 0
      %s236 = sadd.s32 %s235, 1
      %s237 = scalar_select %p234, %s235, %s236
      %p240 = pneg %p234
      %p241 = scmp.eq.s32.totalorder %s26, 1
      %p242 = por %p240, %p241
      %p243 = scmp.ne.s32.totalorder %s235, %s238
      %p244 = scmp.eq.s32.totalorder %s26, 0
      %p245 = por %p243, %p244
      %p246 = scmp.ne.s32.totalorder %s235, %s238
      %p247 = scmp.eq.s32.totalorder %s31, 1
      %p248 = por %p246, %p247
      %p249 = scmp.ne.s32.totalorder %s238, %s239
      %p250 = scmp.eq.s32.totalorder %s31, 0
      %p251 = por %p249, %p250
      %p252 = scmp.ne.s32.totalorder %s238, %s239
      %p253 = scmp.eq.s32.totalorder %s32, 1
      %p254 = por %p252, %p253
      %p256 = scmp.ne.s32.totalorder %s239, %s255
      %p257 = scmp.eq.s32.totalorder %s32, 0
      %p258 = por %p256, %p257
      %p259 = scmp.le.s32.totalorder 1, %s26
      %p260 = scmp.lt.s32.totalorder %s26, 3
      %p261 = pnand %p259, %p260
      %p262 = pneg %p261
      // Predicated region
      $region9: #{tpu_custom_call.1} parent=5 // pred_check
        _
      $region10: #{tpu_custom_call.1} parent=5 // pred_check_branch
        %264 = sbr.rel (%p261) target = $region12
      $region11: #{tpu_custom_call.1} parent=5 // pred_region
        %s265 = ssub.s32 %s26, 1
        // Predicated region
        $region13: #{tpu_custom_call.1} parent=11 // pred_check
          %p266 = pneg %p99
        $region14: #{tpu_custom_call.1} parent=11 // pred_check_branch
          %268 = sbr.rel (%p266) target = $region16
        $region15: #{tpu_custom_call.1} parent=11 // pred_region
          %270 = vsyncadd [#allocation6], 0
          %s271 = sshll.u32 %s2, 4
          %s272 = int_to_ptr.hbm [resolvable:$true] %s271
          %s273 = sshll.u32 [#allocation7], 4
          %s274 = int_to_ptr.vmem [resolvable:$true] %s273
          %279 = dma.hbm_to_vmem [thread:$0]  %s272, 256, %s274, [#allocation6], 64, 64, 4
        $region16: #{tpu_custom_call.1} parent=11 // pred_fallthru
          _
        // Predicated region
        $region17: #{tpu_custom_call.1} parent=11 // pred_check
          %p280 = pneg %p120
        $region18: #{tpu_custom_call.1} parent=11 // pred_check_branch
          %282 = sbr.rel (%p280) target = $region20
        $region19: #{tpu_custom_call.1} parent=11 // pred_region
          %284 = vsyncadd [#allocation9], 0
          %s285 = sshll.u32 %s3, 4
          %s286 = int_to_ptr.hbm [resolvable:$true] %s285
          %s287 = sshll.u32 [#allocation8], 4
          %s288 = int_to_ptr.vmem [resolvable:$true] %s287
          %293 = dma.hbm_to_vmem [thread:$0]  %s286, 2048, %s288, [#allocation9], 128, 128, 8
        $region20: #{tpu_custom_call.1} parent=11 // pred_fallthru
          _
        // Predicated region
        $region21: #{tpu_custom_call.1} parent=11 // pred_check
          %p294 = pneg %p141
        $region22: #{tpu_custom_call.1} parent=11 // pred_check_branch
          %296 = sbr.rel (%p294) target = $region24
        $region23: #{tpu_custom_call.1} parent=11 // pred_region
          %298 = vsyncadd [#allocation9], 0
          %s300 = sshll.u32 %s4, 4
          %s301 = int_to_ptr.hbm [resolvable:$true] %s300
          %s302 = sshll.u32 [#allocation10], 4
          %s303 = int_to_ptr.vmem [resolvable:$true] %s302
          %305 = dma.hbm_to_vmem [thread:$0]  %s301, 32, %s303, [#allocation9]
        $region24: #{tpu_custom_call.1} parent=11 // pred_fallthru
          _
        // Predicated region
        $region25: #{tpu_custom_call.1} parent=11 // pred_check
          %p306 = pneg %p162
        $region26: #{tpu_custom_call.1} parent=11 // pred_check_branch
          %308 = sbr.rel (%p306) target = $region28
        $region27: #{tpu_custom_call.1} parent=11 // pred_region
          %310 = vsyncadd [#allocation12], 0
          %s311 = sshll.u32 %s5, 4
          %s312 = int_to_ptr.hbm [resolvable:$true] %s311
          %s313 = sshll.u32 [#allocation11], 4
          %s314 = int_to_ptr.vmem [resolvable:$true] %s313
          %319 = dma.hbm_to_vmem [thread:$0]  %s312, 8192, %s314, [#allocation12], 256, 256, 16
        $region28: #{tpu_custom_call.1} parent=11 // pred_fallthru
          _
        // Predicated region
        $region29: #{tpu_custom_call.1} parent=11 // pred_check
          %p320 = pneg %p183
        $region30: #{tpu_custom_call.1} parent=11 // pred_check_branch
          %322 = sbr.rel (%p320) target = $region32
        $region31: #{tpu_custom_call.1} parent=11 // pred_region
          _
        $region32: #{tpu_custom_call.1} parent=11 // pred_fallthru
          _
        // Predicated region
        $region33: #{tpu_custom_call.1} parent=11 // pred_check
          %p323 = pneg %p204
        $region34: #{tpu_custom_call.1} parent=11 // pred_check_branch
          %325 = sbr.rel (%p323) target = $region36
        $region35: #{tpu_custom_call.1} parent=11 // pred_region
          %327 = vsyncadd [#allocation12], 0
          %s328 = sshll.u32 %s7, 4
          %s329 = int_to_ptr.hbm [resolvable:$true] %s328
          %s330 = sshll.u32 [#allocation13], 4
          %s331 = int_to_ptr.vmem [resolvable:$true] %s330
          %336 = dma.hbm_to_vmem [thread:$0]  %s329, 4096, %s331, [#allocation12], 64, 64, 4
        $region36: #{tpu_custom_call.1} parent=11 // pred_fallthru
          _
        // Predicated region
        $region37: #{tpu_custom_call.1} parent=11 // pred_check
          %p337 = pneg %p225
        $region38: #{tpu_custom_call.1} parent=11 // pred_check_branch
          %339 = sbr.rel (%p337) target = $region40
        $region39: #{tpu_custom_call.1} parent=11 // pred_region
          _
        $region40: #{tpu_custom_call.1} parent=11 // pred_fallthru
          _
      $region12: #{tpu_custom_call.1} parent=5 // pred_fallthru
        _
      %p340 = scmp.lt.s32.totalorder %s26, 2
      // Predicated region
      $region41: #{tpu_custom_call.1} parent=5 // pred_check
        %p341 = pneg %p340
      $region42: #{tpu_custom_call.1} parent=5 // pred_check_branch
        %343 = sbr.rel (%p341) target = $region44
      $region43: #{tpu_custom_call.1} parent=5 // pred_region
        // Predicated region
        $region45: #{tpu_custom_call.1} parent=43 // pred_check
          %p344 = pneg %p46
        $region46: #{tpu_custom_call.1} parent=43 // pred_check_branch
          %346 = sbr.rel (%p344) target = $region48
        $region47: #{tpu_custom_call.1} parent=43 // pred_region
          %s347 = sand.u32 %s36, 1
          %s348 = scalar_lea.sflag [#allocation3], %s347
          %s349 = sand.u32 %s36, 1
          %s350 = smul.addr %s349, 8
          %s351 = scalar_lea.vmem [#allocation2], %s350
          %s352 = smul.u32 2, %s26
          %354 = vsyncadd %s348, 0
          %s355 = smul.addr %s352, 4
          %s356 = scalar_lea.hbm %s0, %s355
          %s357 = sshll.u32 %s356, 4
          %s358 = int_to_ptr.hbm [resolvable:$true] %s357
          %s359 = sshll.u32 %s351, 4
          %s360 = int_to_ptr.vmem [resolvable:$true] %s359
          %365 = dma.hbm_to_vmem [thread:$0]  %s358, 128, %s360, %s348, 64, 64, 4
        $region48: #{tpu_custom_call.1} parent=43 // pred_fallthru
          _
        // Predicated region
        $region49: #{tpu_custom_call.1} parent=43 // pred_check
          %p366 = pneg %p72
        $region50: #{tpu_custom_call.1} parent=43 // pred_check_branch
          %368 = sbr.rel (%p366) target = $region52
        $region51: #{tpu_custom_call.1} parent=43 // pred_region
          %s369 = sand.u32 %s26, 1
          %s370 = scalar_lea.sflag [#allocation6], %s369
          %s371 = sand.u32 %s62, 1
          %s372 = smul.addr %s371, 8
          %s373 = scalar_lea.vmem [#allocation5], %s372
          %s374 = smul.u32 2, %s26
          %376 = vsyncadd %s370, 0
          %s377 = smul.addr %s374, 4
          %s378 = scalar_lea.hbm %s1, %s377
          %s379 = sshll.u32 %s378, 4
          %s380 = int_to_ptr.hbm [resolvable:$true] %s379
          %s381 = sshll.u32 %s373, 4
          %s382 = int_to_ptr.vmem [resolvable:$true] %s381
          %387 = dma.hbm_to_vmem [thread:$0]  %s380, 128, %s382, %s370, 64, 64, 4
        $region52: #{tpu_custom_call.1} parent=43 // pred_fallthru
          _
      $region44: #{tpu_custom_call.1} parent=5 // pred_fallthru
        _
      %p388 = scmp.le.s32.totalorder 1, %s26
      %p389 = scmp.lt.s32.totalorder %s26, 3
      %p390 = pnand %p388, %p389
      %p391 = pneg %p390
      // Predicated region
      $region53: #{tpu_custom_call.1} parent=5 // pred_check
        _
      $region54: #{tpu_custom_call.1} parent=5 // pred_check_branch
        %393 = sbr.rel (%p390) target = $region56
      $region55: #{tpu_custom_call.1} parent=5 // pred_region
        %s394 = ssub.s32 %s26, 1
        %s395 = sand.u32 %s39, 1
        %s396 = scalar_lea.sflag [#allocation3], %s395
        %s397 = sand.u32 %s39, 1
        %s398 = smul.addr %s397, 8
        %s399 = scalar_lea.vmem [#allocation2], %s398
        // Predicated region
        $region57: #{tpu_custom_call.1} parent=55 // pred_check
          %p400 = pneg %p52
        $region58: #{tpu_custom_call.1} parent=55 // pred_check_branch
          %402 = sbr.rel (%p400) target = $region60
        $region59: #{tpu_custom_call.1} parent=55 // pred_region
          %404 = dma.done %s396, 128
        $region60: #{tpu_custom_call.1} parent=55 // pred_fallthru
          _
        %s405 = sand.u32 %s31, 1
        %s406 = scalar_lea.sflag [#allocation6], %s405
        %s407 = sand.u32 %s65, 1
        %s408 = smul.addr %s407, 8
        %s409 = scalar_lea.vmem [#allocation5], %s408
        // Predicated region
        $region61: #{tpu_custom_call.1} parent=55 // pred_check
          %p410 = pneg %p78
        $region62: #{tpu_custom_call.1} parent=55 // pred_check_branch
          %412 = sbr.rel (%p410) target = $region64
        $region63: #{tpu_custom_call.1} parent=55 // pred_region
          %414 = dma.done %s406, 128
        $region64: #{tpu_custom_call.1} parent=55 // pred_fallthru
          _
        // Predicated region
        $region65: #{tpu_custom_call.1} parent=55 // pred_check
          %p415 = pneg %p99
        $region66: #{tpu_custom_call.1} parent=55 // pred_check_branch
          %417 = sbr.rel (%p415) target = $region68
        $region67: #{tpu_custom_call.1} parent=55 // pred_region
          %419 = dma.done [#allocation6], 256
        $region68: #{tpu_custom_call.1} parent=55 // pred_fallthru
          _
        // Predicated region
        $region69: #{tpu_custom_call.1} parent=55 // pred_check
          %p420 = pneg %p120
        $region70: #{tpu_custom_call.1} parent=55 // pred_check_branch
          %422 = sbr.rel (%p420) target = $region72
        $region71: #{tpu_custom_call.1} parent=55 // pred_region
          %424 = dma.done [#allocation9], 2048
        $region72: #{tpu_custom_call.1} parent=55 // pred_fallthru
          _
        // Predicated region
        $region73: #{tpu_custom_call.1} parent=55 // pred_check
          %p425 = pneg %p141
        $region74: #{tpu_custom_call.1} parent=55 // pred_check_branch
          %427 = sbr.rel (%p425) target = $region76
        $region75: #{tpu_custom_call.1} parent=55 // pred_region
          %429 = dma.done [#allocation9], 32
        $region76: #{tpu_custom_call.1} parent=55 // pred_fallthru
          _
        // Predicated region
        $region77: #{tpu_custom_call.1} parent=55 // pred_check
          %p430 = pneg %p162
        $region78: #{tpu_custom_call.1} parent=55 // pred_check_branch
          %432 = sbr.rel (%p430) target = $region80
        $region79: #{tpu_custom_call.1} parent=55 // pred_region
          %434 = dma.done [#allocation12], 8192
        $region80: #{tpu_custom_call.1} parent=55 // pred_fallthru
          _
        // Predicated region
        $region81: #{tpu_custom_call.1} parent=55 // pred_check
          %p435 = pneg %p204
        $region82: #{tpu_custom_call.1} parent=55 // pred_check_branch
          %437 = sbr.rel (%p435) target = $region84
        $region83: #{tpu_custom_call.1} parent=55 // pred_region
          %439 = dma.done [#allocation12], 4096
        $region84: #{tpu_custom_call.1} parent=55 // pred_fallthru
          _
        %s440 = sand.u32 %s39, 1
        %s441 = scalar_lea.sflag [#allocation3], %s440
        %s442 = sand.u32 %s39, 1
        %s443 = smul.addr %s442, 8
        %s444 = scalar_lea.vmem [#allocation2], %s443
        %p445 = pneg %p52
        %p446 = pneg %p49
        %s447 = sand.u32 %s31, 1
        %s448 = scalar_lea.sflag [#allocation6], %s447
        %s449 = sand.u32 %s65, 1
        %s450 = smul.addr %s449, 8
        %s451 = scalar_lea.vmem [#allocation5], %s450
        %p452 = pneg %p78
        %p453 = pneg %p75
        %p454 = pneg %p99
        %p455 = pneg %p96
        %p456 = pneg %p120
        %p457 = pneg %p117
        %p458 = pneg %p141
        %p459 = pneg %p138
        %p460 = pneg %p162
        %p461 = pneg %p159
        %p462 = pneg %p183
        %p463 = pneg %p180
        %p464 = pneg %p204
        %p465 = pneg %p201
        %p466 = pneg %p225
        %p467 = pneg %p222
        %p468 = pneg %p251
        %p469 = pneg %p248
        %s470 = sand.u32 %s238, 1
        %s471 = scalar_lea.sflag [#allocation4], %s470
        %s472 = sand.u32 %s238, 1
        %s473 = smul.addr %s472, 16
        %s474 = scalar_lea.vmem [#allocation14], %s473
        %s475 = smul.u32 2, %s31
        %s476 = smul.u32 2, %s31
        %s477 = smul.u32 2, %s31
        %v479 = vld [vmem:[%s399] sm:$0xf]
        %v480 = vld [vmem:[%s399 + $0x4] sm:$0xf]
        %v481 = vld [vmem:[#allocation7] sm:$0xf]
        %v482 = vld [vmem:[#allocation7 + $0x4] sm:$0xf]
        %v483 = vld [vmem:[#allocation7 + $0x8] sm:$0xf]
        %v484 = vld [vmem:[#allocation7 + $0xc] sm:$0xf]
        %v485 = vld [vmem:[%s409] sm:$0xf]
        %v486 = vld [vmem:[%s409 + $0x4] sm:$0xf]
        %v487 = vunpack.c.l.bf16 %v485
        %v488 = vunpack.c.l.bf16 %v486
        %v491 = vunpack.c.l.b16 %v479
        %v492 = vunpack.c.l.b16 %v480
        %v493 = vpack.c.b16 %v492, %v491
        %v498 = vunpack.c.l.b16 %v481
        %v499 = vunpack.c.l.b16 %v482
        %v500 = vunpack.c.l.b16 %v483
        %v501 = vunpack.c.l.b16 %v484
        %v502 = vpack.c.b16 %v499, %v498
        %v503 = vpack.c.b16 %v501, %v500
        %vm506 = vcmask 261120
        %v508 = vsel %vm506, %v493, 0
        %510 = vmatpush.bf16.msra.mxu0 0
        %511 = vmatpush.bf16.msra.mxu0 0
        %512 = vmatpush.bf16.msra.mxu0 0
        %513 = vmatpush.bf16.msra.mxu0 0
        %514 = vmatpush.bf16.msra.mxu0 0
        %515 = vmatpush.bf16.msra.mxu0 0
        %516 = vmatpush.bf16.msra.mxu0 %v503
        %517 = vmatpush.bf16.msra.mxu0 %v502
        %518 = vmatmul.bf16.gmra.mxu0 %v508
        %v519 = vpop.f32.mrf.mxu0
        %v520 = vadd.f32 %v487, %v519
        %v521 = vpop.f32.mrf.mxu0
        %v522 = vadd.f32 %v488, %v521
        %523 = vdwg.mxu0
        %vm524 = vcmp.gt.f32.partialorder %v520, 0.0
        %vm525 = vcmp.gt.f32.partialorder %v522, 0.0
        %v526 = vmul.f32 %v520, 0.2
        %v527 = vmul.f32 %v522, 0.2
        %v528 = vsel %vm524, %v520, %v526
        %v529 = vsel %vm525, %v522, %v527
        %v530 = vpack.c.bf16 %v529, %v528
        %v531 = vld [vmem:[#allocation8] sm:$0xff]
        %v532 = vld [vmem:[#allocation8 + $0x8] sm:$0xff]
        %v533 = vld [vmem:[#allocation8 + $0x10] sm:$0xff]
        %v534 = vld [vmem:[#allocation8 + $0x18] sm:$0xff]
        %v535 = vld [vmem:[#allocation8 + $0x20] sm:$0xff]
        %v536 = vld [vmem:[#allocation8 + $0x28] sm:$0xff]
        %v537 = vld [vmem:[#allocation8 + $0x30] sm:$0xff]
        %v538 = vld [vmem:[#allocation8 + $0x38] sm:$0xff]
        %v539 = vld [vmem:[#allocation8 + $0x40] sm:$0xff]
        %v540 = vld [vmem:[#allocation8 + $0x48] sm:$0xff]
        %v541 = vld [vmem:[#allocation8 + $0x50] sm:$0xff]
        %v542 = vld [vmem:[#allocation8 + $0x58] sm:$0xff]
        %v543 = vld [vmem:[#allocation8 + $0x60] sm:$0xff]
        %v544 = vld [vmem:[#allocation8 + $0x68] sm:$0xff]
        %v545 = vld [vmem:[#allocation8 + $0x70] sm:$0xff]
        %v546 = vld [vmem:[#allocation8 + $0x78] sm:$0xff]
        %v547 = vld [vmem:[#allocation10] sm:$0x3]
        %v549 = vperm.slane %v547, 0
        %v550 = vperm.slane %v547, 1
        %v569 = vunpack.c.l.b16 %v531
        %v570 = vunpack.c.h.b16 %v531
        %v571 = vunpack.c.l.b16 %v532
        %v572 = vunpack.c.h.b16 %v532
        %v573 = vunpack.c.l.b16 %v533
        %v574 = vunpack.c.h.b16 %v533
        %v575 = vunpack.c.l.b16 %v534
        %v576 = vunpack.c.h.b16 %v534
        %v577 = vunpack.c.l.b16 %v535
        %v578 = vunpack.c.h.b16 %v535
        %v579 = vunpack.c.l.b16 %v536
        %v580 = vunpack.c.h.b16 %v536
        %v581 = vunpack.c.l.b16 %v537
        %v582 = vunpack.c.h.b16 %v537
        %v583 = vunpack.c.l.b16 %v538
        %v584 = vunpack.c.h.b16 %v538
        %v585 = vunpack.c.l.b16 %v539
        %v586 = vunpack.c.h.b16 %v539
        %v587 = vunpack.c.l.b16 %v540
        %v588 = vunpack.c.h.b16 %v540
        %v589 = vunpack.c.l.b16 %v541
        %v590 = vunpack.c.h.b16 %v541
        %v591 = vunpack.c.l.b16 %v542
        %v592 = vunpack.c.h.b16 %v542
        %v593 = vunpack.c.l.b16 %v543
        %v594 = vunpack.c.h.b16 %v543
        %v595 = vunpack.c.l.b16 %v544
        %v596 = vunpack.c.h.b16 %v544
        %v597 = vunpack.c.l.b16 %v545
        %v598 = vunpack.c.h.b16 %v545
        %v599 = vunpack.c.l.b16 %v546
        %v600 = vunpack.c.h.b16 %v546
        %v601 = vpack.c.b16 %v571, %v569
        %v602 = vpack.c.b16 %v572, %v570
        %v603 = vpack.c.b16 %v575, %v573
        %v604 = vpack.c.b16 %v576, %v574
        %v605 = vpack.c.b16 %v579, %v577
        %v606 = vpack.c.b16 %v580, %v578
        %v607 = vpack.c.b16 %v583, %v581
        %v608 = vpack.c.b16 %v584, %v582
        %v609 = vpack.c.b16 %v587, %v585
        %v610 = vpack.c.b16 %v588, %v586
        %v611 = vpack.c.b16 %v591, %v589
        %v612 = vpack.c.b16 %v592, %v590
        %v613 = vpack.c.b16 %v595, %v593
        %v614 = vpack.c.b16 %v596, %v594
        %v615 = vpack.c.b16 %v599, %v597
        %v616 = vpack.c.b16 %v600, %v598
        %633 = vmatpush.bf16.msra.mxu0 %v615
        %634 = vmatpush.bf16.msra.mxu0 %v613
        %635 = vmatpush.bf16.msra.mxu0 %v611
        %636 = vmatpush.bf16.msra.mxu0 %v609
        %637 = vmatpush.bf16.msra.mxu0 %v607
        %638 = vmatpush.bf16.msra.mxu0 %v605
        %639 = vmatpush.bf16.msra.mxu0 %v603
        %640 = vmatpush.bf16.msra.mxu0 %v601
        %641 = vmatmul.bf16.gmra.mxu0 %v530
        %v642 = vpop.f32.mrf.mxu0
        %v643 = vadd.f32 %v549, %v642
        %v644 = vpop.f32.mrf.mxu0
        %v645 = vadd.f32 %v549, %v644
        %646 = vdwg.mxu0
        %647 = vmatpush.bf16.msra.mxu0 %v616
        %648 = vmatpush.bf16.msra.mxu0 %v614
        %649 = vmatpush.bf16.msra.mxu0 %v612
        %650 = vmatpush.bf16.msra.mxu0 %v610
        %651 = vmatpush.bf16.msra.mxu0 %v608
        %652 = vmatpush.bf16.msra.mxu0 %v606
        %653 = vmatpush.bf16.msra.mxu0 %v604
        %654 = vmatpush.bf16.msra.mxu0 %v602
        %655 = vmatmul.bf16.gmra.mxu0 %v530
        %v656 = vpop.f32.mrf.mxu0
        %v657 = vadd.f32 %v550, %v656
        %v658 = vpop.f32.mrf.mxu0
        %v659 = vadd.f32 %v550, %v658
        %660 = vdwg.mxu0
        %vm661 = vcmp.gt.f32.partialorder %v643, 0.0
        %vm662 = vcmp.gt.f32.partialorder %v657, 0.0
        %vm663 = vcmp.gt.f32.partialorder %v645, 0.0
        %vm664 = vcmp.gt.f32.partialorder %v659, 0.0
        %v665 = vmul.f32 %v643, 0.2
        %v666 = vmul.f32 %v657, 0.2
        %v667 = vmul.f32 %v645, 0.2
        %v668 = vmul.f32 %v659, 0.2
        %v669 = vsel %vm661, %v643, %v665
        %v670 = vsel %vm662, %v657, %v666
        %v671 = vsel %vm663, %v645, %v667
        %v672 = vsel %vm664, %v659, %v668
        %v673 = vpack.c.bf16 %v671, %v669
        %v674 = vpack.c.bf16 %v672, %v670
        %v675 = vld [vmem:[#allocation11] sm:$0xff]
        %v676 = vld [vmem:[#allocation11 + $0x8] sm:$0xff]
        %v677 = vld [vmem:[#allocation11 + $0x10] sm:$0xff]
        %v678 = vld [vmem:[#allocation11 + $0x18] sm:$0xff]
        %v679 = vld [vmem:[#allocation11 + $0x20] sm:$0xff]
        %v680 = vld [vmem:[#allocation11 + $0x28] sm:$0xff]
        %v681 = vld [vmem:[#allocation11 + $0x30] sm:$0xff]
        %v682 = vld [vmem:[#allocation11 + $0x38] sm:$0xff]
        %v683 = vld [vmem:[#allocation11 + $0x40] sm:$0xff]
        %v684 = vld [vmem:[#allocation11 + $0x48] sm:$0xff]
        %v685 = vld [vmem:[#allocation11 + $0x50] sm:$0xff]
        %v686 = vld [vmem:[#allocation11 + $0x58] sm:$0xff]
        %v687 = vld [vmem:[#allocation11 + $0x60] sm:$0xff]
        %v688 = vld [vmem:[#allocation11 + $0x68] sm:$0xff]
        %v689 = vld [vmem:[#allocation11 + $0x70] sm:$0xff]
        %v690 = vld [vmem:[#allocation11 + $0x78] sm:$0xff]
        %v691 = vld [vmem:[#allocation11 + $0x80] sm:$0xff]
        %v692 = vld [vmem:[#allocation11 + $0x88] sm:$0xff]
        %v693 = vld [vmem:[#allocation11 + $0x90] sm:$0xff]
        %v694 = vld [vmem:[#allocation11 + $0x98] sm:$0xff]
        %v695 = vld [vmem:[#allocation11 + $0xa0] sm:$0xff]
        %v696 = vld [vmem:[#allocation11 + $0xa8] sm:$0xff]
        %v697 = vld [vmem:[#allocation11 + $0xb0] sm:$0xff]
        %v698 = vld [vmem:[#allocation11 + $0xb8] sm:$0xff]
        %v699 = vld [vmem:[#allocation11 + $0xc0] sm:$0xff]
        %v700 = vld [vmem:[#allocation11 + $0xc8] sm:$0xff]
        %v701 = vld [vmem:[#allocation11 + $0xd0] sm:$0xff]
        %v702 = vld [vmem:[#allocation11 + $0xd8] sm:$0xff]
        %v703 = vld [vmem:[#allocation11 + $0xe0] sm:$0xff]
        %v704 = vld [vmem:[#allocation11 + $0xe8] sm:$0xff]
        %v705 = vld [vmem:[#allocation11 + $0xf0] sm:$0xff]
        %v706 = vld [vmem:[#allocation11 + $0xf8] sm:$0xff]
        %v707 = vld [vmem:[#allocation11 + $0x100] sm:$0xff]
        %v708 = vld [vmem:[#allocation11 + $0x108] sm:$0xff]
        %v709 = vld [vmem:[#allocation11 + $0x110] sm:$0xff]
        %v710 = vld [vmem:[#allocation11 + $0x118] sm:$0xff]
        %v711 = vld [vmem:[#allocation11 + $0x120] sm:$0xff]
        %v712 = vld [vmem:[#allocation11 + $0x128] sm:$0xff]
        %v713 = vld [vmem:[#allocation11 + $0x130] sm:$0xff]
        %v714 = vld [vmem:[#allocation11 + $0x138] sm:$0xff]
        %v715 = vld [vmem:[#allocation11 + $0x140] sm:$0xff]
        %v716 = vld [vmem:[#allocation11 + $0x148] sm:$0xff]
        %v717 = vld [vmem:[#allocation11 + $0x150] sm:$0xff]
        %v718 = vld [vmem:[#allocation11 + $0x158] sm:$0xff]
        %v719 = vld [vmem:[#allocation11 + $0x160] sm:$0xff]
        %v720 = vld [vmem:[#allocation11 + $0x168] sm:$0xff]
        %v721 = vld [vmem:[#allocation11 + $0x170] sm:$0xff]
        %v722 = vld [vmem:[#allocation11 + $0x178] sm:$0xff]
        %v723 = vld [vmem:[#allocation11 + $0x180] sm:$0xff]
        %v724 = vld [vmem:[#allocation11 + $0x188] sm:$0xff]
        %v725 = vld [vmem:[#allocation11 + $0x190] sm:$0xff]
        %v726 = vld [vmem:[#allocation11 + $0x198] sm:$0xff]
        %v727 = vld [vmem:[#allocation11 + $0x1a0] sm:$0xff]
        %v728 = vld [vmem:[#allocation11 + $0x1a8] sm:$0xff]
        %v729 = vld [vmem:[#allocation11 + $0x1b0] sm:$0xff]
        %v730 = vld [vmem:[#allocation11 + $0x1b8] sm:$0xff]
        %v731 = vld [vmem:[#allocation11 + $0x1c0] sm:$0xff]
        %v732 = vld [vmem:[#allocation11 + $0x1c8] sm:$0xff]
        %v733 = vld [vmem:[#allocation11 + $0x1d0] sm:$0xff]
        %v734 = vld [vmem:[#allocation11 + $0x1d8] sm:$0xff]
        %v735 = vld [vmem:[#allocation11 + $0x1e0] sm:$0xff]
        %v736 = vld [vmem:[#allocation11 + $0x1e8] sm:$0xff]
        %v737 = vld [vmem:[#allocation11 + $0x1f0] sm:$0xff]
        %v738 = vld [vmem:[#allocation11 + $0x1f8] sm:$0xff]
        %v739 = vld [vmem:[%s6] sm:$0xf]
        %v741 = vperm.slane %v739, 0
        %v742 = vperm.slane %v739, 1
        %v743 = vperm.slane %v739, 2
        %v744 = vperm.slane %v739, 3
        %v813 = vunpack.c.l.b16 %v675
        %v814 = vunpack.c.h.b16 %v675
        %v815 = vunpack.c.l.b16 %v676
        %v816 = vunpack.c.h.b16 %v676
        %v817 = vunpack.c.l.b16 %v677
        %v818 = vunpack.c.h.b16 %v677
        %v819 = vunpack.c.l.b16 %v678
        %v820 = vunpack.c.h.b16 %v678
        %v821 = vunpack.c.l.b16 %v679
        %v822 = vunpack.c.h.b16 %v679
        %v823 = vunpack.c.l.b16 %v680
        %v824 = vunpack.c.h.b16 %v680
        %v825 = vunpack.c.l.b16 %v681
        %v826 = vunpack.c.h.b16 %v681
        %v827 = vunpack.c.l.b16 %v682
        %v828 = vunpack.c.h.b16 %v682
        %v829 = vunpack.c.l.b16 %v683
        %v830 = vunpack.c.h.b16 %v683
        %v831 = vunpack.c.l.b16 %v684
        %v832 = vunpack.c.h.b16 %v684
        %v833 = vunpack.c.l.b16 %v685
        %v834 = vunpack.c.h.b16 %v685
        %v835 = vunpack.c.l.b16 %v686
        %v836 = vunpack.c.h.b16 %v686
        %v837 = vunpack.c.l.b16 %v687
        %v838 = vunpack.c.h.b16 %v687
        %v839 = vunpack.c.l.b16 %v688
        %v840 = vunpack.c.h.b16 %v688
        %v841 = vunpack.c.l.b16 %v689
        %v842 = vunpack.c.h.b16 %v689
        %v843 = vunpack.c.l.b16 %v690
        %v844 = vunpack.c.h.b16 %v690
        %v845 = vunpack.c.l.b16 %v691
        %v846 = vunpack.c.h.b16 %v691
        %v847 = vunpack.c.l.b16 %v692
        %v848 = vunpack.c.h.b16 %v692
        %v849 = vunpack.c.l.b16 %v693
        %v850 = vunpack.c.h.b16 %v693
        %v851 = vunpack.c.l.b16 %v694
        %v852 = vunpack.c.h.b16 %v694
        %v853 = vunpack.c.l.b16 %v695
        %v854 = vunpack.c.h.b16 %v695
        %v855 = vunpack.c.l.b16 %v696
        %v856 = vunpack.c.h.b16 %v696
        %v857 = vunpack.c.l.b16 %v697
        %v858 = vunpack.c.h.b16 %v697
        %v859 = vunpack.c.l.b16 %v698
        %v860 = vunpack.c.h.b16 %v698
        %v861 = vunpack.c.l.b16 %v699
        %v862 = vunpack.c.h.b16 %v699
        %v863 = vunpack.c.l.b16 %v700
        %v864 = vunpack.c.h.b16 %v700
        %v865 = vunpack.c.l.b16 %v701
        %v866 = vunpack.c.h.b16 %v701
        %v867 = vunpack.c.l.b16 %v702
        %v868 = vunpack.c.h.b16 %v702
        %v869 = vunpack.c.l.b16 %v703
        %v870 = vunpack.c.h.b16 %v703
        %v871 = vunpack.c.l.b16 %v704
        %v872 = vunpack.c.h.b16 %v704
        %v873 = vunpack.c.l.b16 %v705
        %v874 = vunpack.c.h.b16 %v705
        %v875 = vunpack.c.l.b16 %v706
        %v876 = vunpack.c.h.b16 %v706
        %v877 = vunpack.c.l.b16 %v707
        %v878 = vunpack.c.h.b16 %v707
        %v879 = vunpack.c.l.b16 %v708
        %v880 = vunpack.c.h.b16 %v708
        %v881 = vunpack.c.l.b16 %v709
        %v882 = vunpack.c.h.b16 %v709
        %v883 = vunpack.c.l.b16 %v710
        %v884 = vunpack.c.h.b16 %v710
        %v885 = vunpack.c.l.b16 %v711
        %v886 = vunpack.c.h.b16 %v711
        %v887 = vunpack.c.l.b16 %v712
        %v888 = vunpack.c.h.b16 %v712
        %v889 = vunpack.c.l.b16 %v713
        %v890 = vunpack.c.h.b16 %v713
        %v891 = vunpack.c.l.b16 %v714
        %v892 = vunpack.c.h.b16 %v714
        %v893 = vunpack.c.l.b16 %v715
        %v894 = vunpack.c.h.b16 %v715
        %v895 = vunpack.c.l.b16 %v716
        %v896 = vunpack.c.h.b16 %v716
        %v897 = vunpack.c.l.b16 %v717
        %v898 = vunpack.c.h.b16 %v717
        %v899 = vunpack.c.l.b16 %v718
        %v900 = vunpack.c.h.b16 %v718
        %v901 = vunpack.c.l.b16 %v719
        %v902 = vunpack.c.h.b16 %v719
        %v903 = vunpack.c.l.b16 %v720
        %v904 = vunpack.c.h.b16 %v720
        %v905 = vunpack.c.l.b16 %v721
        %v906 = vunpack.c.h.b16 %v721
        %v907 = vunpack.c.l.b16 %v722
        %v908 = vunpack.c.h.b16 %v722
        %v909 = vunpack.c.l.b16 %v723
        %v910 = vunpack.c.h.b16 %v723
        %v911 = vunpack.c.l.b16 %v724
        %v912 = vunpack.c.h.b16 %v724
        %v913 = vunpack.c.l.b16 %v725
        %v914 = vunpack.c.h.b16 %v725
        %v915 = vunpack.c.l.b16 %v726
        %v916 = vunpack.c.h.b16 %v726
        %v917 = vunpack.c.l.b16 %v727
        %v918 = vunpack.c.h.b16 %v727
        %v919 = vunpack.c.l.b16 %v728
        %v920 = vunpack.c.h.b16 %v728
        %v921 = vunpack.c.l.b16 %v729
        %v922 = vunpack.c.h.b16 %v729
        %v923 = vunpack.c.l.b16 %v730
        %v924 = vunpack.c.h.b16 %v730
        %v925 = vunpack.c.l.b16 %v731
        %v926 = vunpack.c.h.b16 %v731
        %v927 = vunpack.c.l.b16 %v732
        %v928 = vunpack.c.h.b16 %v732
        %v929 = vunpack.c.l.b16 %v733
        %v930 = vunpack.c.h.b16 %v733
        %v931 = vunpack.c.l.b16 %v734
        %v932 = vunpack.c.h.b16 %v734
        %v933 = vunpack.c.l.b16 %v735
        %v934 = vunpack.c.h.b16 %v735
        %v935 = vunpack.c.l.b16 %v736
        %v936 = vunpack.c.h.b16 %v736
        %v937 = vunpack.c.l.b16 %v737
        %v938 = vunpack.c.h.b16 %v737
        %v939 = vunpack.c.l.b16 %v738
        %v940 = vunpack.c.h.b16 %v738
        %v941 = vpack.c.b16 %v817, %v813
        %v942 = vpack.c.b16 %v818, %v814
        %v943 = vpack.c.b16 %v819, %v815
        %v944 = vpack.c.b16 %v820, %v816
        %v945 = vpack.c.b16 %v825, %v821
        %v946 = vpack.c.b16 %v826, %v822
        %v947 = vpack.c.b16 %v827, %v823
        %v948 = vpack.c.b16 %v828, %v824
        %v949 = vpack.c.b16 %v833, %v829
        %v950 = vpack.c.b16 %v834, %v830
        %v951 = vpack.c.b16 %v835, %v831
        %v952 = vpack.c.b16 %v836, %v832
        %v953 = vpack.c.b16 %v841, %v837
        %v954 = vpack.c.b16 %v842, %v838
        %v955 = vpack.c.b16 %v843, %v839
        %v956 = vpack.c.b16 %v844, %v840
        %v957 = vpack.c.b16 %v849, %v845
        %v958 = vpack.c.b16 %v850, %v846
        %v959 = vpack.c.b16 %v851, %v847
        %v960 = vpack.c.b16 %v852, %v848
        %v961 = vpack.c.b16 %v857, %v853
        %v962 = vpack.c.b16 %v858, %v854
        %v963 = vpack.c.b16 %v859, %v855
        %v964 = vpack.c.b16 %v860, %v856
        %v965 = vpack.c.b16 %v865, %v861
        %v966 = vpack.c.b16 %v866, %v862
        %v967 = vpack.c.b16 %v867, %v863
        %v968 = vpack.c.b16 %v868, %v864
        %v969 = vpack.c.b16 %v873, %v869
        %v970 = vpack.c.b16 %v874, %v870
        %v971 = vpack.c.b16 %v875, %v871
        %v972 = vpack.c.b16 %v876, %v872
        %v973 = vpack.c.b16 %v881, %v877
        %v974 = vpack.c.b16 %v882, %v878
        %v975 = vpack.c.b16 %v883, %v879
        %v976 = vpack.c.b16 %v884, %v880
        %v977 = vpack.c.b16 %v889, %v885
        %v978 = vpack.c.b16 %v890, %v886
        %v979 = vpack.c.b16 %v891, %v887
        %v980 = vpack.c.b16 %v892, %v888
        %v981 = vpack.c.b16 %v897, %v893
        %v982 = vpack.c.b16 %v898, %v894
        %v983 = vpack.c.b16 %v899, %v895
        %v984 = vpack.c.b16 %v900, %v896
        %v985 = vpack.c.b16 %v905, %v901
        %v986 = vpack.c.b16 %v906, %v902
        %v987 = vpack.c.b16 %v907, %v903
        %v988 = vpack.c.b16 %v908, %v904
        %v989 = vpack.c.b16 %v913, %v909
        %v990 = vpack.c.b16 %v914, %v910
        %v991 = vpack.c.b16 %v915, %v911
        %v992 = vpack.c.b16 %v916, %v912
        %v993 = vpack.c.b16 %v921, %v917
        %v994 = vpack.c.b16 %v922, %v918
        %v995 = vpack.c.b16 %v923, %v919
        %v996 = vpack.c.b16 %v924, %v920
        %v997 = vpack.c.b16 %v929, %v925
        %v998 = vpack.c.b16 %v930, %v926
        %v999 = vpack.c.b16 %v931, %v927
        %v1000 = vpack.c.b16 %v932, %v928
        %v1001 = vpack.c.b16 %v937, %v933
        %v1002 = vpack.c.b16 %v938, %v934
        %v1003 = vpack.c.b16 %v939, %v935
        %v1004 = vpack.c.b16 %v940, %v936
        %1069 = vmatpush.bf16.msra.mxu0 %v969
        %1070 = vmatpush.bf16.msra.mxu0 %v965
        %1071 = vmatpush.bf16.msra.mxu0 %v961
        %1072 = vmatpush.bf16.msra.mxu0 %v957
        %1073 = vmatpush.bf16.msra.mxu0 %v953
        %1074 = vmatpush.bf16.msra.mxu0 %v949
        %1075 = vmatpush.bf16.msra.mxu0 %v945
        %1076 = vmatpush.bf16.msra.mxu0 %v941
        %1077 = vmatmul.bf16.gmra.mxu0 %v673
        %v1078 = vpop.f32.mrf.mxu0
        %v1079 = vadd.f32 %v741, %v1078
        %v1080 = vpop.f32.mrf.mxu0
        %v1081 = vadd.f32 %v741, %v1080
        %1082 = vdwg.mxu0
        %1083 = vmatpush.bf16.msra.mxu0 %v1001
        %1084 = vmatpush.bf16.msra.mxu0 %v997
        %1085 = vmatpush.bf16.msra.mxu0 %v993
        %1086 = vmatpush.bf16.msra.mxu0 %v989
        %1087 = vmatpush.bf16.msra.mxu0 %v985
        %1088 = vmatpush.bf16.msra.mxu0 %v981
        %1089 = vmatpush.bf16.msra.mxu0 %v977
        %1090 = vmatpush.bf16.msra.mxu0 %v973
        %1091 = vmatmul.bf16.gmra.mxu0 %v674
        %v1092 = vpop.f32.mrf.mxu0
        %v1093 = vadd.f32 %v1079, %v1092
        %v1094 = vpop.f32.mrf.mxu0
        %v1095 = vadd.f32 %v1081, %v1094
        %1096 = vdwg.mxu0
        %1097 = vmatpush.bf16.msra.mxu0 %v970
        %1098 = vmatpush.bf16.msra.mxu0 %v966
        %1099 = vmatpush.bf16.msra.mxu0 %v962
        %1100 = vmatpush.bf16.msra.mxu0 %v958
        %1101 = vmatpush.bf16.msra.mxu0 %v954
        %1102 = vmatpush.bf16.msra.mxu0 %v950
        %1103 = vmatpush.bf16.msra.mxu0 %v946
        %1104 = vmatpush.bf16.msra.mxu0 %v942
        %1105 = vmatmul.bf16.gmra.mxu0 %v673
        %v1106 = vpop.f32.mrf.mxu0
        %v1107 = vadd.f32 %v742, %v1106
        %v1108 = vpop.f32.mrf.mxu0
        %v1109 = vadd.f32 %v742, %v1108
        %1110 = vdwg.mxu0
        %1111 = vmatpush.bf16.msra.mxu0 %v1002
        %1112 = vmatpush.bf16.msra.mxu0 %v998
        %1113 = vmatpush.bf16.msra.mxu0 %v994
        %1114 = vmatpush.bf16.msra.mxu0 %v990
        %1115 = vmatpush.bf16.msra.mxu0 %v986
        %1116 = vmatpush.bf16.msra.mxu0 %v982
        %1117 = vmatpush.bf16.msra.mxu0 %v978
        %1118 = vmatpush.bf16.msra.mxu0 %v974
        %1119 = vmatmul.bf16.gmra.mxu0 %v674
        %v1120 = vpop.f32.mrf.mxu0
        %v1121 = vadd.f32 %v1107, %v1120
        %v1122 = vpop.f32.mrf.mxu0
        %v1123 = vadd.f32 %v1109, %v1122
        %1124 = vdwg.mxu0
        %1125 = vmatpush.bf16.msra.mxu0 %v971
        %1126 = vmatpush.bf16.msra.mxu0 %v967
        %1127 = vmatpush.bf16.msra.mxu0 %v963
        %1128 = vmatpush.bf16.msra.mxu0 %v959
        %1129 = vmatpush.bf16.msra.mxu0 %v955
        %1130 = vmatpush.bf16.msra.mxu0 %v951
        %1131 = vmatpush.bf16.msra.mxu0 %v947
        %1132 = vmatpush.bf16.msra.mxu0 %v943
        %1133 = vmatmul.bf16.gmra.mxu0 %v673
        %v1134 = vpop.f32.mrf.mxu0
        %v1135 = vadd.f32 %v743, %v1134
        %v1136 = vpop.f32.mrf.mxu0
        %v1137 = vadd.f32 %v743, %v1136
        %1138 = vdwg.mxu0
        %1139 = vmatpush.bf16.msra.mxu0 %v1003
        %1140 = vmatpush.bf16.msra.mxu0 %v999
        %1141 = vmatpush.bf16.msra.mxu0 %v995
        %1142 = vmatpush.bf16.msra.mxu0 %v991
        %1143 = vmatpush.bf16.msra.mxu0 %v987
        %1144 = vmatpush.bf16.msra.mxu0 %v983
        %1145 = vmatpush.bf16.msra.mxu0 %v979
        %1146 = vmatpush.bf16.msra.mxu0 %v975
        %1147 = vmatmul.bf16.gmra.mxu0 %v674
        %v1148 = vpop.f32.mrf.mxu0
        %v1149 = vadd.f32 %v1135, %v1148
        %v1150 = vpop.f32.mrf.mxu0
        %v1151 = vadd.f32 %v1137, %v1150
        %1152 = vdwg.mxu0
        %1153 = vmatpush.bf16.msra.mxu0 %v972
        %1154 = vmatpush.bf16.msra.mxu0 %v968
        %1155 = vmatpush.bf16.msra.mxu0 %v964
        %1156 = vmatpush.bf16.msra.mxu0 %v960
        %1157 = vmatpush.bf16.msra.mxu0 %v956
        %1158 = vmatpush.bf16.msra.mxu0 %v952
        %1159 = vmatpush.bf16.msra.mxu0 %v948
        %1160 = vmatpush.bf16.msra.mxu0 %v944
        %1161 = vmatmul.bf16.gmra.mxu0 %v673
        %v1162 = vpop.f32.mrf.mxu0
        %v1163 = vadd.f32 %v744, %v1162
        %v1164 = vpop.f32.mrf.mxu0
        %v1165 = vadd.f32 %v744, %v1164
        %1166 = vdwg.mxu0
        %1167 = vmatpush.bf16.msra.mxu0 %v1004
        %1168 = vmatpush.bf16.msra.mxu0 %v1000
        %1169 = vmatpush.bf16.msra.mxu0 %v996
        %1170 = vmatpush.bf16.msra.mxu0 %v992
        %1171 = vmatpush.bf16.msra.mxu0 %v988
        %1172 = vmatpush.bf16.msra.mxu0 %v984
        %1173 = vmatpush.bf16.msra.mxu0 %v980
        %1174 = vmatpush.bf16.msra.mxu0 %v976
        %1175 = vmatmul.bf16.gmra.mxu0 %v674
        %v1176 = vpop.f32.mrf.mxu0
        %v1177 = vadd.f32 %v1163, %v1176
        %v1178 = vpop.f32.mrf.mxu0
        %v1179 = vadd.f32 %v1165, %v1178
        %1180 = vdwg.mxu0
        %vm1181 = vcmp.gt.f32.partialorder %v1093, 0.0
        %vm1182 = vcmp.gt.f32.partialorder %v1121, 0.0
        %vm1183 = vcmp.gt.f32.partialorder %v1149, 0.0
        %vm1184 = vcmp.gt.f32.partialorder %v1177, 0.0
        %vm1185 = vcmp.gt.f32.partialorder %v1095, 0.0
        %vm1186 = vcmp.gt.f32.partialorder %v1123, 0.0
        %vm1187 = vcmp.gt.f32.partialorder %v1151, 0.0
        %vm1188 = vcmp.gt.f32.partialorder %v1179, 0.0
        %v1189 = vmul.f32 %v1093, 0.2
        %v1190 = vmul.f32 %v1121, 0.2
        %v1191 = vmul.f32 %v1149, 0.2
        %v1192 = vmul.f32 %v1177, 0.2
        %v1193 = vmul.f32 %v1095, 0.2
        %v1194 = vmul.f32 %v1123, 0.2
        %v1195 = vmul.f32 %v1151, 0.2
        %v1196 = vmul.f32 %v1179, 0.2
        %v1197 = vsel %vm1181, %v1093, %v1189
        %v1198 = vsel %vm1182, %v1121, %v1190
        %v1199 = vsel %vm1183, %v1149, %v1191
        %v1200 = vsel %vm1184, %v1177, %v1192
        %v1201 = vsel %vm1185, %v1095, %v1193
        %v1202 = vsel %vm1186, %v1123, %v1194
        %v1203 = vsel %vm1187, %v1151, %v1195
        %v1204 = vsel %vm1188, %v1179, %v1196
        %v1205 = vpack.c.bf16 %v1201, %v1197
        %v1206 = vpack.c.bf16 %v1202, %v1198
        %v1207 = vpack.c.bf16 %v1203, %v1199
        %v1208 = vpack.c.bf16 %v1204, %v1200
        %v1209 = vld [vmem:[#allocation13] sm:$0xf]
        %v1210 = vld [vmem:[#allocation13 + $0x4] sm:$0xf]
        %v1211 = vld [vmem:[#allocation13 + $0x8] sm:$0xf]
        %v1212 = vld [vmem:[#allocation13 + $0xc] sm:$0xf]
        %v1213 = vld [vmem:[#allocation13 + $0x10] sm:$0xf]
        %v1214 = vld [vmem:[#allocation13 + $0x14] sm:$0xf]
        %v1215 = vld [vmem:[#allocation13 + $0x18] sm:$0xf]
        %v1216 = vld [vmem:[#allocation13 + $0x1c] sm:$0xf]
        %v1217 = vld [vmem:[#allocation13 + $0x20] sm:$0xf]
        %v1218 = vld [vmem:[#allocation13 + $0x24] sm:$0xf]
        %v1219 = vld [vmem:[#allocation13 + $0x28] sm:$0xf]
        %v1220 = vld [vmem:[#allocation13 + $0x2c] sm:$0xf]
        %v1221 = vld [vmem:[#allocation13 + $0x30] sm:$0xf]
        %v1222 = vld [vmem:[#allocation13 + $0x34] sm:$0xf]
        %v1223 = vld [vmem:[#allocation13 + $0x38] sm:$0xf]
        %v1224 = vld [vmem:[#allocation13 + $0x3c] sm:$0xf]
        %v1225 = vld [vmem:[#allocation13 + $0x40] sm:$0xf]
        %v1226 = vld [vmem:[#allocation13 + $0x44] sm:$0xf]
        %v1227 = vld [vmem:[#allocation13 + $0x48] sm:$0xf]
        %v1228 = vld [vmem:[#allocation13 + $0x4c] sm:$0xf]
        %v1229 = vld [vmem:[#allocation13 + $0x50] sm:$0xf]
        %v1230 = vld [vmem:[#allocation13 + $0x54] sm:$0xf]
        %v1231 = vld [vmem:[#allocation13 + $0x58] sm:$0xf]
        %v1232 = vld [vmem:[#allocation13 + $0x5c] sm:$0xf]
        %v1233 = vld [vmem:[#allocation13 + $0x60] sm:$0xf]
        %v1234 = vld [vmem:[#allocation13 + $0x64] sm:$0xf]
        %v1235 = vld [vmem:[#allocation13 + $0x68] sm:$0xf]
        %v1236 = vld [vmem:[#allocation13 + $0x6c] sm:$0xf]
        %v1237 = vld [vmem:[#allocation13 + $0x70] sm:$0xf]
        %v1238 = vld [vmem:[#allocation13 + $0x74] sm:$0xf]
        %v1239 = vld [vmem:[#allocation13 + $0x78] sm:$0xf]
        %v1240 = vld [vmem:[#allocation13 + $0x7c] sm:$0xf]
        %v1241 = vld [vmem:[#allocation13 + $0x80] sm:$0xf]
        %v1242 = vld [vmem:[#allocation13 + $0x84] sm:$0xf]
        %v1243 = vld [vmem:[#allocation13 + $0x88] sm:$0xf]
        %v1244 = vld [vmem:[#allocation13 + $0x8c] sm:$0xf]
        %v1245 = vld [vmem:[#allocation13 + $0x90] sm:$0xf]
        %v1246 = vld [vmem:[#allocation13 + $0x94] sm:$0xf]
        %v1247 = vld [vmem:[#allocation13 + $0x98] sm:$0xf]
        %v1248 = vld [vmem:[#allocation13 + $0x9c] sm:$0xf]
        %v1249 = vld [vmem:[#allocation13 + $0xa0] sm:$0xf]
        %v1250 = vld [vmem:[#allocation13 + $0xa4] sm:$0xf]
        %v1251 = vld [vmem:[#allocation13 + $0xa8] sm:$0xf]
        %v1252 = vld [vmem:[#allocation13 + $0xac] sm:$0xf]
        %v1253 = vld [vmem:[#allocation13 + $0xb0] sm:$0xf]
        %v1254 = vld [vmem:[#allocation13 + $0xb4] sm:$0xf]
        %v1255 = vld [vmem:[#allocation13 + $0xb8] sm:$0xf]
        %v1256 = vld [vmem:[#allocation13 + $0xbc] sm:$0xf]
        %v1257 = vld [vmem:[#allocation13 + $0xc0] sm:$0xf]
        %v1258 = vld [vmem:[#allocation13 + $0xc4] sm:$0xf]
        %v1259 = vld [vmem:[#allocation13 + $0xc8] sm:$0xf]
        %v1260 = vld [vmem:[#allocation13 + $0xcc] sm:$0xf]
        %v1261 = vld [vmem:[#allocation13 + $0xd0] sm:$0xf]
        %v1262 = vld [vmem:[#allocation13 + $0xd4] sm:$0xf]
        %v1263 = vld [vmem:[#allocation13 + $0xd8] sm:$0xf]
        %v1264 = vld [vmem:[#allocation13 + $0xdc] sm:$0xf]
        %v1265 = vld [vmem:[#allocation13 + $0xe0] sm:$0xf]
        %v1266 = vld [vmem:[#allocation13 + $0xe4] sm:$0xf]
        %v1267 = vld [vmem:[#allocation13 + $0xe8] sm:$0xf]
        %v1268 = vld [vmem:[#allocation13 + $0xec] sm:$0xf]
        %v1269 = vld [vmem:[#allocation13 + $0xf0] sm:$0xf]
        %v1270 = vld [vmem:[#allocation13 + $0xf4] sm:$0xf]
        %v1271 = vld [vmem:[#allocation13 + $0xf8] sm:$0xf]
        %v1272 = vld [vmem:[#allocation13 + $0xfc] sm:$0xf]
        %v1273 = vld [vmem:[%s8] sm:$0x1]
        %v1275 = vperm.slane %v1273, 0
        %v1341 = vunpack.c.l.b16 %v1209
        %v1342 = vunpack.c.l.b16 %v1210
        %v1343 = vunpack.c.l.b16 %v1211
        %v1344 = vunpack.c.l.b16 %v1212
        %v1345 = vunpack.c.l.b16 %v1213
        %v1346 = vunpack.c.l.b16 %v1214
        %v1347 = vunpack.c.l.b16 %v1215
        %v1348 = vunpack.c.l.b16 %v1216
        %v1349 = vunpack.c.l.b16 %v1217
        %v1350 = vunpack.c.l.b16 %v1218
        %v1351 = vunpack.c.l.b16 %v1219
        %v1352 = vunpack.c.l.b16 %v1220
        %v1353 = vunpack.c.l.b16 %v1221
        %v1354 = vunpack.c.l.b16 %v1222
        %v1355 = vunpack.c.l.b16 %v1223
        %v1356 = vunpack.c.l.b16 %v1224
        %v1357 = vunpack.c.l.b16 %v1225
        %v1358 = vunpack.c.l.b16 %v1226
        %v1359 = vunpack.c.l.b16 %v1227
        %v1360 = vunpack.c.l.b16 %v1228
        %v1361 = vunpack.c.l.b16 %v1229
        %v1362 = vunpack.c.l.b16 %v1230
        %v1363 = vunpack.c.l.b16 %v1231
        %v1364 = vunpack.c.l.b16 %v1232
        %v1365 = vunpack.c.l.b16 %v1233
        %v1366 = vunpack.c.l.b16 %v1234
        %v1367 = vunpack.c.l.b16 %v1235
        %v1368 = vunpack.c.l.b16 %v1236
        %v1369 = vunpack.c.l.b16 %v1237
        %v1370 = vunpack.c.l.b16 %v1238
        %v1371 = vunpack.c.l.b16 %v1239
        %v1372 = vunpack.c.l.b16 %v1240
        %v1373 = vunpack.c.l.b16 %v1241
        %v1374 = vunpack.c.l.b16 %v1242
        %v1375 = vunpack.c.l.b16 %v1243
        %v1376 = vunpack.c.l.b16 %v1244
        %v1377 = vunpack.c.l.b16 %v1245
        %v1378 = vunpack.c.l.b16 %v1246
        %v1379 = vunpack.c.l.b16 %v1247
        %v1380 = vunpack.c.l.b16 %v1248
        %v1381 = vunpack.c.l.b16 %v1249
        %v1382 = vunpack.c.l.b16 %v1250
        %v1383 = vunpack.c.l.b16 %v1251
        %v1384 = vunpack.c.l.b16 %v1252
        %v1385 = vunpack.c.l.b16 %v1253
        %v1386 = vunpack.c.l.b16 %v1254
        %v1387 = vunpack.c.l.b16 %v1255
        %v1388 = vunpack.c.l.b16 %v1256
        %v1389 = vunpack.c.l.b16 %v1257
        %v1390 = vunpack.c.l.b16 %v1258
        %v1391 = vunpack.c.l.b16 %v1259
        %v1392 = vunpack.c.l.b16 %v1260
        %v1393 = vunpack.c.l.b16 %v1261
        %v1394 = vunpack.c.l.b16 %v1262
        %v1395 = vunpack.c.l.b16 %v1263
        %v1396 = vunpack.c.l.b16 %v1264
        %v1397 = vunpack.c.l.b16 %v1265
        %v1398 = vunpack.c.l.b16 %v1266
        %v1399 = vunpack.c.l.b16 %v1267
        %v1400 = vunpack.c.l.b16 %v1268
        %v1401 = vunpack.c.l.b16 %v1269
        %v1402 = vunpack.c.l.b16 %v1270
        %v1403 = vunpack.c.l.b16 %v1271
        %v1404 = vunpack.c.l.b16 %v1272
        %v1405 = vpack.c.b16 %v1342, %v1341
        %v1406 = vpack.c.b16 %v1344, %v1343
        %v1407 = vpack.c.b16 %v1346, %v1345
        %v1408 = vpack.c.b16 %v1348, %v1347
        %v1409 = vpack.c.b16 %v1350, %v1349
        %v1410 = vpack.c.b16 %v1352, %v1351
        %v1411 = vpack.c.b16 %v1354, %v1353
        %v1412 = vpack.c.b16 %v1356, %v1355
        %v1413 = vpack.c.b16 %v1358, %v1357
        %v1414 = vpack.c.b16 %v1360, %v1359
        %v1415 = vpack.c.b16 %v1362, %v1361
        %v1416 = vpack.c.b16 %v1364, %v1363
        %v1417 = vpack.c.b16 %v1366, %v1365
        %v1418 = vpack.c.b16 %v1368, %v1367
        %v1419 = vpack.c.b16 %v1370, %v1369
        %v1420 = vpack.c.b16 %v1372, %v1371
        %v1421 = vpack.c.b16 %v1374, %v1373
        %v1422 = vpack.c.b16 %v1376, %v1375
        %v1423 = vpack.c.b16 %v1378, %v1377
        %v1424 = vpack.c.b16 %v1380, %v1379
        %v1425 = vpack.c.b16 %v1382, %v1381
        %v1426 = vpack.c.b16 %v1384, %v1383
        %v1427 = vpack.c.b16 %v1386, %v1385
        %v1428 = vpack.c.b16 %v1388, %v1387
        %v1429 = vpack.c.b16 %v1390, %v1389
        %v1430 = vpack.c.b16 %v1392, %v1391
        %v1431 = vpack.c.b16 %v1394, %v1393
        %v1432 = vpack.c.b16 %v1396, %v1395
        %v1433 = vpack.c.b16 %v1398, %v1397
        %v1434 = vpack.c.b16 %v1400, %v1399
        %v1435 = vpack.c.b16 %v1402, %v1401
        %v1436 = vpack.c.b16 %v1404, %v1403
        %1469 = vmatpush.bf16.msra.mxu0 %v1412
        %1470 = vmatpush.bf16.msra.mxu0 %v1411
        %1471 = vmatpush.bf16.msra.mxu0 %v1410
        %1472 = vmatpush.bf16.msra.mxu0 %v1409
        %1473 = vmatpush.bf16.msra.mxu0 %v1408
        %1474 = vmatpush.bf16.msra.mxu0 %v1407
        %1475 = vmatpush.bf16.msra.mxu0 %v1406
        %1476 = vmatpush.bf16.msra.mxu0 %v1405
        %1477 = vmatmul.bf16.gmra.mxu0 %v1205
        %v1478 = vpop.f32.mrf.mxu0
        %v1479 = vadd.f32 %v1275, %v1478
        %v1480 = vpop.f32.mrf.mxu0
        %v1481 = vadd.f32 %v1275, %v1480
        %1482 = vdwg.mxu0
        %1483 = vmatpush.bf16.msra.mxu0 %v1420
        %1484 = vmatpush.bf16.msra.mxu0 %v1419
        %1485 = vmatpush.bf16.msra.mxu0 %v1418
        %1486 = vmatpush.bf16.msra.mxu0 %v1417
        %1487 = vmatpush.bf16.msra.mxu0 %v1416
        %1488 = vmatpush.bf16.msra.mxu0 %v1415
        %1489 = vmatpush.bf16.msra.mxu0 %v1414
        %1490 = vmatpush.bf16.msra.mxu0 %v1413
        %1491 = vmatmul.bf16.gmra.mxu0 %v1206
        %v1492 = vpop.f32.mrf.mxu0
        %v1493 = vadd.f32 %v1479, %v1492
        %v1494 = vpop.f32.mrf.mxu0
        %v1495 = vadd.f32 %v1481, %v1494
        %1496 = vdwg.mxu0
        %1497 = vmatpush.bf16.msra.mxu0 %v1428
        %1498 = vmatpush.bf16.msra.mxu0 %v1427
        %1499 = vmatpush.bf16.msra.mxu0 %v1426
        %1500 = vmatpush.bf16.msra.mxu0 %v1425
        %1501 = vmatpush.bf16.msra.mxu0 %v1424
        %1502 = vmatpush.bf16.msra.mxu0 %v1423
        %1503 = vmatpush.bf16.msra.mxu0 %v1422
        %1504 = vmatpush.bf16.msra.mxu0 %v1421
        %1505 = vmatmul.bf16.gmra.mxu0 %v1207
        %v1506 = vpop.f32.mrf.mxu0
        %v1507 = vadd.f32 %v1493, %v1506
        %v1508 = vpop.f32.mrf.mxu0
        %v1509 = vadd.f32 %v1495, %v1508
        %1510 = vdwg.mxu0
        %1511 = vmatpush.bf16.msra.mxu0 %v1436
        %1512 = vmatpush.bf16.msra.mxu0 %v1435
        %1513 = vmatpush.bf16.msra.mxu0 %v1434
        %1514 = vmatpush.bf16.msra.mxu0 %v1433
        %1515 = vmatpush.bf16.msra.mxu0 %v1432
        %1516 = vmatpush.bf16.msra.mxu0 %v1431
        %1517 = vmatpush.bf16.msra.mxu0 %v1430
        %1518 = vmatpush.bf16.msra.mxu0 %v1429
        %1519 = vmatmul.bf16.gmra.mxu0 %v1208
        %v1520 = vpop.f32.mrf.mxu0
        %v1521 = vadd.f32 %v1507, %v1520
        %v1522 = vpop.f32.mrf.mxu0
        %v1523 = vadd.f32 %v1509, %v1522
        %1524 = vdwg.mxu0
        %1525 = vmax.xlane.f32.xlu0 %v1521
        %v1526 = vpop.xlane.xlu0 %1525
        %1527 = vmax.xlane.f32.xlu0 %v1523
        %v1528 = vpop.xlane.xlu0 %1527
        %v1529 = vsub.f32 %v1521, %v1526
        %v1530 = vsub.f32 %v1523, %v1528
        %v1531 = vmul.f32 %v1529, 1.442695
        %v1532 = vpow.pop %v1531
        %v1533 = vmul.f32 %v1530, 1.442695
        %v1534 = vpow.pop %v1533
        %1535 = vadd.xlane.f32.xlu0 %v1532
        %v1536 = vpop.xlane.xlu0 %1535
        %1537 = vadd.xlane.f32.xlu0 %v1534
        %v1538 = vpop.xlane.xlu0 %1537
        %v1539 = vrcp.pop %v1536
        %v1540 = vrcp.pop %v1538
        %v1541 = vmul.f32 %v1532, %v1539
        %v1542 = vmul.f32 %v1534, %v1540
        %1543 = vst [vmem:[%s474] sm:$0xff] %v1541
        %1544 = vst [vmem:[%s474 + $0x8] sm:$0xff] %v1542
        %s1545 = sand.u32 %s238, 1
        %s1546 = scalar_lea.sflag [#allocation4], %s1545
        %s1547 = sand.u32 %s238, 1
        %s1548 = smul.addr %s1547, 16
        %s1549 = scalar_lea.vmem [#allocation14], %s1548
        // Predicated region
        $region85: #{tpu_custom_call.1} parent=55 // pred_check
          %p1550 = pneg %p248
        $region86: #{tpu_custom_call.1} parent=55 // pred_check_branch
          %1552 = sbr.rel (%p1550) target = $region88
        $region87: #{tpu_custom_call.1} parent=55 // pred_region
          %s1553 = smul.u32 2, %s31
          %1555 = vsyncadd %s1546, 0
          %s1556 = smul.addr %s1553, 8
          %s1557 = scalar_lea.hbm %s9, %s1556
          %s1558 = sshll.u32 %s1549, 4
          %s1559 = int_to_ptr.vmem [resolvable:$true] %s1558
          %s1560 = sshll.u32 %s1557, 4
          %s1561 = int_to_ptr.hbm [resolvable:$true] %s1560
          %1566 = dma.vmem_to_hbm [thread:$0]  %s1559, 256, %s1561, %s1546, 128, 128, 8
        $region88: #{tpu_custom_call.1} parent=55 // pred_fallthru
          _
      $region56: #{tpu_custom_call.1} parent=5 // pred_fallthru
        _
      %p1567 = scmp.le.s32.totalorder 2, %s26
      // Predicated region
      $region89: #{tpu_custom_call.1} parent=5 // pred_check
        %p1568 = pneg %p1567
      $region90: #{tpu_custom_call.1} parent=5 // pred_check_branch
        %1570 = sbr.rel (%p1568) target = $region92
      $region91: #{tpu_custom_call.1} parent=5 // pred_region
        %s1571 = ssub.s32 %s26, 2
        // Predicated region
        $region93: #{tpu_custom_call.1} parent=91 // pred_check
          %p1572 = pneg %p254
        $region94: #{tpu_custom_call.1} parent=91 // pred_check_branch
          %1574 = sbr.rel (%p1572) target = $region96
        $region95: #{tpu_custom_call.1} parent=91 // pred_region
          %s1575 = sand.u32 %s239, 1
          %s1576 = scalar_lea.sflag [#allocation4], %s1575
          %s1577 = sand.u32 %s239, 1
          %s1578 = smul.addr %s1577, 16
          %s1579 = scalar_lea.vmem [#allocation14], %s1578
          %1581 = dma.done %s1576, 256
        $region96: #{tpu_custom_call.1} parent=91 // pred_fallthru
          _
      $region92: #{tpu_custom_call.1} parent=5 // pred_fallthru
        _
    $region6: #{tpu_custom_call.1} parent=1 // loop_footer
      %s30 = sadd.s32 1, %s26
    $region7: #{tpu_custom_call.1} parent=1 // loop_footer_branch
      %25 = sbr.rel target = $region3
    $region8: #{tpu_custom_call.1} parent=1 // loop_exit
      _
    %1582 = vsyncpa [#allocation3], 1
    %s1583 = scalar_lea.sflag [#allocation3], 1
    %1584 = vsyncpa %s1583, 1
    %1585 = vsyncpa [#allocation6], 1
    %s1586 = scalar_lea.sflag [#allocation6], 1
    %1587 = vsyncpa %s1586, 1
    %1588 = vsyncpa [#allocation9], 1
    %1589 = vsyncpa [#allocation12], 1
    %1590 = vsyncpa [#allocation4], 1
    %s1591 = scalar_lea.sflag [#allocation4], 1
    %1592 = vsyncpa %s1591, 1

</llo_original>
